<compile_context>
chip_gen: v6e
topology: v6e:2x2x1
jax: 0.10.0
libtpu: 0.0.40
codegen_flags: <defaults>
</compile_context>

<pallas_src>
import functools
import math

import jax
import jax.numpy as jnp
from jax import lax
from jax.experimental import pallas as pl
from jax.experimental.pallas import tpu as pltpu


def _attn_kernel(x_ref, wq_ref, bq_ref, wk_ref, bk_ref, wv_ref, bv_ref,
                 o_ref, k_scr, v_scr, *, head_size, heads_per_block, q_tile):
    """One grid step = (batch b, head-block hb, query block qi).

    Refs:
      x_ref        : (1, S, H)       bf16  full x row-block for batch b (DMA'd once per b)
      wq/wk/wv_ref : (1, HB*hd, H)   bf16  this head-block's rows of the (out, in) weights
      bq_ref       : (1, 1, HB*hd)   f32   row-layout bias (for Q in natural orientation)
      bk/bv_ref    : (1, HB*hd, 1)   f32   column-layout bias (K/V are kept transposed)
      o_ref        : (1, tq, HB*hd)  f32   output tile, already in PyTorch (B, S, H) layout
      k_scr, v_scr : (HB, hd, S)     bf16  per-head transposed K/V, persist across qi
    """
    qi = pl.program_id(2)
    hd = head_size
    HB = heads_per_block

    # Contract the shared H axis of both operands -> no in-kernel transposes anywhere.
    dn_x_wT = (((1,), (1,)), ((), ()))   # (rows, H) x (N, H) -> (rows, N)   == x @ W.T
    dn_w_xT = (((1,), (1,)), ((), ()))   # (N, H)   x (S, H) -> (N, S)      == (x @ W.T).T

    # --- K/V projection: once per (batch, head-block), reused for every query block.
    #     Full-width matmul (N = HB*hd) keeps the MXU output columns busy; results are
    #     stored transposed (hd, S) so the lane axis stays dense even when hd < 128.
    @pl.when(qi == 0)
    def _():
        x_all = x_ref[0]                                              # (S, H) bf16
        kT = lax.dot_general(wk_ref[0], x_all, dn_w_xT,
                             preferred_element_type=jnp.float32) + bk_ref[0]
        vT = lax.dot_general(wv_ref[0], x_all, dn_w_xT,
                             preferred_element_type=jnp.float32) + bv_ref[0]
        kT = kT.astype(k_scr.dtype)                                   # (HB*hd, S) bf16
        vT = vT.astype(v_scr.dtype)
        for h in range(HB):                                           # amortized over qi
            k_scr[h] = kT[h * hd:(h + 1) * hd, :]
            v_scr[h] = vT[h * hd:(h + 1) * hd, :]

    # --- Q projection for this query tile, sliced from the already-resident x block
    #     (no separate xq input stream -> no per-head re-DMA of query tiles).
    start = pl.multiple_of(qi * q_tile, q_tile)
    xq = x_ref[0, pl.ds(start, q_tile), :]                            # (tq, H) bf16
    q = lax.dot_general(xq, wq_ref[0], dn_x_wT,
                        preferred_element_type=jnp.float32) + bq_ref[0]   # (tq, HB*hd) f32
    q = (q * (1.0 / math.sqrt(hd))).astype(k_scr.dtype)               # scale q, not scores

    # --- Per-head attention; HB is a small compile-time constant -> fully unrolled.
    outs = []
    for h in range(HB):
        q_h = q[:, h * hd:(h + 1) * hd]                               # (tq, hd) bf16
        s = lax.dot_general(q_h, k_scr[h], (((1,), (0,)), ((), ())),
                            preferred_element_type=jnp.float32)       # (tq, S) f32
        # TODO(synk): optional attention mask (module forward exercised with mask=None).
        m = jnp.max(s, axis=-1, keepdims=True)
        p = jnp.exp(s - m)
        denom = jnp.sum(p, axis=-1, keepdims=True)
        # TODO(synk): attention-weight dropout is identity in eval mode; training mode
        #             would use pltpu.prng_seed / pltpu.prng_random_bits here.
        o_h = lax.dot_general(p.astype(v_scr.dtype), v_scr[h],
                              (((1,), (1,)), ((), ())),
                              preferred_element_type=jnp.float32)      # (tq, hd) f32
        # Deferred softmax normalization: scale the (tq, hd) result instead of the
        # (tq, S) probabilities; the divide goes to the EUP.
        outs.append(o_h * pl.reciprocal(denom, approx=True))

    # Single lane-dense store, already in PyTorch (B, S, H) layout.
    o_ref[0] = jnp.concatenate(outs, axis=-1).astype(o_ref.dtype)


def _vmem_limit_bytes(default=64 * 1024 * 1024):
    """Per-generation scoped-VMEM limit: physical capacity minus compiler headroom."""
    try:
        cap = int(pltpu.get_tpu_info().vmem_capacity_bytes)
        return max(32 * 1024 * 1024, cap - 16 * 1024 * 1024)   # ~112 MiB v5e/v6e, ~48 MiB v7x
    except Exception:
        return default


def _pick_head_block(num_heads, head_size, hidden_size):
    """Smallest head block whose output width is lane-dense (>=128 and %128==0).

    Falls back to all heads in one block (width == hidden_size, always a legal
    full-dim BlockSpec) when no such divisor exists (e.g. tiny test shapes).
    """
    for hb in range(1, num_heads + 1):
        if num_heads % hb:
            continue
        n = hb * head_size
        if n >= 128 and n % 128 == 0:
            return hb
    return num_heads


def _pick_q_tile(seq_len, vmem_limit):
    """Largest divisor of S (multiple of 8) up to a VMEM-dependent target.

    Falls back to the full sequence (one fat block) rather than accepting a tiny tile.
    TODO(synk): pad S to a multiple of 128 and mask padded keys for ragged long sequences.
    """
    target = 512 if vmem_limit >= 96 * 1024 * 1024 else 256
    if seq_len <= target:
        return seq_len
    best = None
    for cand in range(target, 7, -8):
        if seq_len % cand == 0:
            best = cand
            break
    if best is None or best < 64:
        return seq_len
    return best


def self_attention(x, wq, bq, wk, bk, wv, bv, *, num_heads):
    """x: (B, S, H) f32; w*: (H, H) PyTorch (out, in); b*: (H,). Returns (B, S, H) f32."""
    B, S, H = x.shape
    hd = H // num_heads
    HB = _pick_head_block(num_heads, hd, H)
    n_hb = num_heads // HB
    HBhd = HB * hd

    vmem_limit = _vmem_limit_bytes()
    tq = _pick_q_tile(S, vmem_limit)
    n_q = S // tq

    cdt = jnp.bfloat16  # MXU input dtype; accumulation / softmax stats stay f32
    x_c = x.astype(cdt)
    # Group `out_features` rows by head block: (H, H) -> (n_hb, HB*hd, H). Because heads
    # are contiguous in the PyTorch layout, this is a plain reshape (no permutation).
    wq_b = wq.reshape(n_hb, HBhd, H).astype(cdt)
    wk_b = wk.reshape(n_hb, HBhd, H).astype(cdt)
    wv_b = wv.reshape(n_hb, HBhd, H).astype(cdt)
    bq_b = bq.reshape(n_hb, 1, HBhd).astype(jnp.float32)   # row bias for Q
    bk_b = bk.reshape(n_hb, HBhd, 1).astype(jnp.float32)   # column bias for transposed K
    bv_b = bv.reshape(n_hb, HBhd, 1).astype(jnp.float32)   # column bias for transposed V

    kernel = functools.partial(_attn_kernel, head_size=hd,
                               heads_per_block=HB, q_tile=tq)

    w_spec = pl.BlockSpec((1, HBhd, H), lambda b, hb, qi: (hb, 0, 0))
    bq_spec = pl.BlockSpec((1, 1, HBhd), lambda b, hb, qi: (hb, 0, 0))
    bc_spec = pl.BlockSpec((1, HBhd, 1), lambda b, hb, qi: (hb, 0, 0))

    # Advisory roofline for XLA's scheduler around the custom call.
    flops = 6 * B * S * H * H + 4 * B * S * S * H
    bytes_accessed = (B * S * H * 2 + 3 * H * H * 2 + 6 * H * 4 + B * S * H * 4)
    cost = pl.CostEstimate(flops=flops,
                           transcendentals=B * num_heads * S * S,
                           bytes_accessed=bytes_accessed)

    out = pl.pallas_call(
        kernel,
        out_shape=jax.ShapeDtypeStruct((B, S, H), jnp.float32),
        grid_spec=pltpu.PrefetchScalarGridSpec(
            num_scalar_prefetch=0,
            grid=(B, n_hb, n_q),
            in_specs=[
                # Single x stream: full (S, H) row-block, re-DMA'd only when b changes.
                # TODO(synk): pipeline_mode=pl.Buffered(1) / flash KV tiling for v7x.
                pl.BlockSpec((1, S, H), lambda b, hb, qi: (b, 0, 0)),
                w_spec, bq_spec,        # query projection
                w_spec, bc_spec,        # key projection
                w_spec, bc_spec,        # value projection
            ],
            # Output written directly in the PyTorch (B, S, H) layout: column block = hb.
            out_specs=pl.BlockSpec((1, tq, HBhd), lambda b, hb, qi: (b, qi, hb)),
            scratch_shapes=[pltpu.VMEM((HB, hd, S), cdt),   # K^T for current (b, hb)
                            pltpu.VMEM((HB, hd, S), cdt)],  # V^T for current (b, hb)
        ),
        compiler_params=pltpu.CompilerParams(
            dimension_semantics=("parallel", "parallel", "arbitrary"),
            vmem_limit_bytes=vmem_limit,
        ),
        cost_estimate=cost,
    )(x_c, wq_b, bq_b, wk_b, bk_b, wv_b, bv_b)
    return out


def _reference(x, wq, bq, wk, bk, wv, bv, *, num_heads):
    B, S, H = x.shape
    hd = H // num_heads

    def lin(x, w, b):
        return x @ w.T + b

    q = lin(x, wq, bq).reshape(B, S, num_heads, hd).transpose(0, 2, 1, 3)
    k = lin(x, wk, bk).reshape(B, S, num_heads, hd).transpose(0, 2, 1, 3)
    v = lin(x, wv, bv).reshape(B, S, num_heads, hd).transpose(0, 2, 1, 3)
    scores = jnp.einsum("bhqd,bhkd->bhqk", q, k) / math.sqrt(hd)
    attn = jax.nn.softmax(scores, axis=-1)
    out = jnp.einsum("bhqk,bhkd->bhqd", attn, v)
    return out.transpose(0, 2, 1, 3).reshape(B, S, H)


if __name__ == "__main__":
    B, S, H, num_heads = 2, 8, 32, 4
    key = jax.random.PRNGKey(0)
    kx, kq, kbq, kk, kbk, kv, kbv = jax.random.split(key, 7)

    # Deterministic inputs (mimics PyTorch Linear uniform(-1/sqrt(H), 1/sqrt(H)) init).
    bound = 1.0 / math.sqrt(H)
    x = jax.random.normal(kx, (B, S, H), dtype=jnp.float32)
    wq = jax.random.uniform(kq, (H, H), minval=-bound, maxval=bound, dtype=jnp.float32)
    bq = jax.random.uniform(kbq, (H,), minval=-bound, maxval=bound, dtype=jnp.float32)
    wk = jax.random.uniform(kk, (H, H), minval=-bound, maxval=bound, dtype=jnp.float32)
    bk = jax.random.uniform(kbk, (H,), minval=-bound, maxval=bound, dtype=jnp.float32)
    wv = jax.random.uniform(kv, (H, H), minval=-bound, maxval=bound, dtype=jnp.float32)
    bv = jax.random.uniform(kbv, (H,), minval=-bound, maxval=bound, dtype=jnp.float32)

    out = self_attention(x, wq, bq, wk, bk, wv, bv, num_heads=num_heads)
    out = jax.block_until_ready(out)

    ref = _reference(x, wq, bq, wk, bk, wv, bv, num_heads=num_heads)
    assert out.shape == (B, S, H)
    # Kernel uses bf16 MXU inputs (fp32 accumulation) + approx reciprocal, so compare
    # against the fp32 reference with a bf16-appropriate tolerance.
    assert jnp.allclose(out, ref, atol=3e-2, rtol=3e-2), "mismatch vs reference"

    print("KERNEL_OK")
</pallas_src>

<mosaic_0001>
module attributes {stable_mosaic.version = 11 : i64} {
  func.func @_attn_kernel(%arg0: i32, %arg1: i32, %arg2: i32, %arg3: memref<1x8x32xbf16, #tpu.memory_space<vmem>>, %arg4: memref<1x32x32xbf16, #tpu.memory_space<vmem>>, %arg5: memref<1x1x32xf32, #tpu.memory_space<vmem>>, %arg6: memref<1x32x32xbf16, #tpu.memory_space<vmem>>, %arg7: memref<1x32x1xf32, #tpu.memory_space<vmem>>, %arg8: memref<1x32x32xbf16, #tpu.memory_space<vmem>>, %arg9: memref<1x32x1xf32, #tpu.memory_space<vmem>>, %arg10: memref<1x8x32xf32, #tpu.memory_space<vmem>>, %arg11: memref<4x8x8xbf16, #tpu.memory_space<vmem>>, %arg12: memref<4x8x8xbf16, #tpu.memory_space<vmem>>) attributes {dimension_semantics = [#tpu.dimension_semantics<parallel>, #tpu.dimension_semantics<parallel>, #tpu.dimension_semantics<arbitrary>], iteration_bounds = array<i64: 2, 1, 1>, scalar_prefetch = 0 : i64, scratch_operands = 2 : i64, tpu.core_type = #tpu.core_type<tc>, window_params = [{transform_indices = @transform_0, window_bounds = array<i64: 1, 8, 32>}, {transform_indices = @transform_1, window_bounds = array<i64: 1, 32, 32>}, {transform_indices = @transform_2, window_bounds = array<i64: 1, 1, 32>}, {transform_indices = @transform_3, window_bounds = array<i64: 1, 32, 32>}, {transform_indices = @transform_4, window_bounds = array<i64: 1, 32, 1>}, {transform_indices = @transform_5, window_bounds = array<i64: 1, 32, 32>}, {transform_indices = @transform_6, window_bounds = array<i64: 1, 32, 1>}, {transform_indices = @transform_7, window_bounds = array<i64: 1, 8, 32>}]} {
    %c0_i32 = arith.constant 0 : i32
    %0 = arith.cmpi eq, %arg2, %c0_i32 : i32
    %1 = arith.extui %0 : i1 to i32
    %c0_i32_0 = arith.constant 0 : i32
    %2 = arith.cmpi ne, %1, %c0_i32_0 : i32
    scf.if %2 {
      %c0_49 = arith.constant 0 : index
      %c0_50 = arith.constant 0 : index
      %c0_51 = arith.constant 0 : index
      %94 = vector.load %arg3[%c0_49, %c0_50, %c0_51] : memref<1x8x32xbf16, #tpu.memory_space<vmem>>, vector<1x8x32xbf16>
      %95 = vector.shape_cast %94 : vector<1x8x32xbf16> to vector<8x32xbf16>
      %c0_52 = arith.constant 0 : index
      %c0_53 = arith.constant 0 : index
      %c0_54 = arith.constant 0 : index
      %96 = vector.load %arg6[%c0_52, %c0_53, %c0_54] : memref<1x32x32xbf16, #tpu.memory_space<vmem>>, vector<1x32x32xbf16>
      %97 = vector.shape_cast %96 : vector<1x32x32xbf16> to vector<32x32xbf16>
      %cst_55 = arith.constant dense<0.000000e+00> : vector<32x8xf32>
      %98 = tpu.matmul %97, %95, %cst_55 {dimension_numbers = #tpu.dot_dimension_numbers<[1], [1], [0], [0], [0, 0, 1, 0], [], []>} : vector<32x32xbf16>, vector<8x32xbf16>, vector<32x8xf32> -> vector<32x8xf32>
      %c0_56 = arith.constant 0 : index
      %c0_57 = arith.constant 0 : index
      %c0_58 = arith.constant 0 : index
      %99 = vector.load %arg7[%c0_56, %c0_57, %c0_58] : memref<1x32x1xf32, #tpu.memory_space<vmem>>, vector<1x32x1xf32>
      %100 = vector.shape_cast %99 : vector<1x32x1xf32> to vector<32x1xf32>
      %101 = vector.broadcast %100 : vector<32x1xf32> to vector<32x8xf32>
      %102 = arith.addf %98, %101 : vector<32x8xf32>
      %c0_59 = arith.constant 0 : index
      %c0_60 = arith.constant 0 : index
      %c0_61 = arith.constant 0 : index
      %103 = vector.load %arg8[%c0_59, %c0_60, %c0_61] : memref<1x32x32xbf16, #tpu.memory_space<vmem>>, vector<1x32x32xbf16>
      %104 = vector.shape_cast %103 : vector<1x32x32xbf16> to vector<32x32xbf16>
      %cst_62 = arith.constant dense<0.000000e+00> : vector<32x8xf32>
      %105 = tpu.matmul %104, %95, %cst_62 {dimension_numbers = #tpu.dot_dimension_numbers<[1], [1], [0], [0], [0, 0, 1, 0], [], []>} : vector<32x32xbf16>, vector<8x32xbf16>, vector<32x8xf32> -> vector<32x8xf32>
      %c0_63 = arith.constant 0 : index
      %c0_64 = arith.constant 0 : index
      %c0_65 = arith.constant 0 : index
      %106 = vector.load %arg9[%c0_63, %c0_64, %c0_65] : memref<1x32x1xf32, #tpu.memory_space<vmem>>, vector<1x32x1xf32>
      %107 = vector.shape_cast %106 : vector<1x32x1xf32> to vector<32x1xf32>
      %108 = vector.broadcast %107 : vector<32x1xf32> to vector<32x8xf32>
      %109 = arith.addf %105, %108 : vector<32x8xf32>
      %110 = arith.truncf %102 : vector<32x8xf32> to vector<32x8xbf16>
      %111 = arith.truncf %109 : vector<32x8xf32> to vector<32x8xbf16>
      %112 = vector.extract_strided_slice %110 {offsets = [0, 0], sizes = [8, 8], strides = [1, 1]} : vector<32x8xbf16> to vector<8x8xbf16>
      %c0_66 = arith.constant 0 : index
      %c0_67 = arith.constant 0 : index
      %c0_68 = arith.constant 0 : index
      %113 = vector.load %arg11[%c0_66, %c0_67, %c0_68] : memref<4x8x8xbf16, #tpu.memory_space<vmem>>, vector<1x8x8xbf16>
      %114 = vector.shape_cast %113 : vector<1x8x8xbf16> to vector<8x8xbf16>
      %115 = vector.shape_cast %112 : vector<8x8xbf16> to vector<1x8x8xbf16>
      tpu.vector_store %arg11[%c0_66, %c0_67, %c0_68], %115 {strides = array<i32>} : memref<4x8x8xbf16, #tpu.memory_space<vmem>>, vector<1x8x8xbf16>,
      %116 = vector.extract_strided_slice %111 {offsets = [0, 0], sizes = [8, 8], strides = [1, 1]} : vector<32x8xbf16> to vector<8x8xbf16>
      %c0_69 = arith.constant 0 : index
      %c0_70 = arith.constant 0 : index
      %c0_71 = arith.constant 0 : index
      %117 = vector.load %arg12[%c0_69, %c0_70, %c0_71] : memref<4x8x8xbf16, #tpu.memory_space<vmem>>, vector<1x8x8xbf16>
      %118 = vector.shape_cast %117 : vector<1x8x8xbf16> to vector<8x8xbf16>
      %119 = vector.shape_cast %116 : vector<8x8xbf16> to vector<1x8x8xbf16>
      tpu.vector_store %arg12[%c0_69, %c0_70, %c0_71], %119 {strides = array<i32>} : memref<4x8x8xbf16, #tpu.memory_space<vmem>>, vector<1x8x8xbf16>,
      %120 = vector.extract_strided_slice %110 {offsets = [8, 0], sizes = [8, 8], strides = [1, 1]} : vector<32x8xbf16> to vector<8x8xbf16>
      %c1_72 = arith.constant 1 : index
      %c0_73 = arith.constant 0 : index
      %c0_74 = arith.constant 0 : index
      %121 = vector.load %arg11[%c1_72, %c0_73, %c0_74] : memref<4x8x8xbf16, #tpu.memory_space<vmem>>, vector<1x8x8xbf16>
      %122 = vector.shape_cast %121 : vector<1x8x8xbf16> to vector<8x8xbf16>
      %123 = vector.shape_cast %120 : vector<8x8xbf16> to vector<1x8x8xbf16>
      tpu.vector_store %arg11[%c1_72, %c0_73, %c0_74], %123 {strides = array<i32>} : memref<4x8x8xbf16, #tpu.memory_space<vmem>>, vector<1x8x8xbf16>,
      %124 = vector.extract_strided_slice %111 {offsets = [8, 0], sizes = [8, 8], strides = [1, 1]} : vector<32x8xbf16> to vector<8x8xbf16>
      %c1_75 = arith.constant 1 : index
      %c0_76 = arith.constant 0 : index
      %c0_77 = arith.constant 0 : index
      %125 = vector.load %arg12[%c1_75, %c0_76, %c0_77] : memref<4x8x8xbf16, #tpu.memory_space<vmem>>, vector<1x8x8xbf16>
      %126 = vector.shape_cast %125 : vector<1x8x8xbf16> to vector<8x8xbf16>
      %127 = vector.shape_cast %124 : vector<8x8xbf16> to vector<1x8x8xbf16>
      tpu.vector_store %arg12[%c1_75, %c0_76, %c0_77], %127 {strides = array<i32>} : memref<4x8x8xbf16, #tpu.memory_space<vmem>>, vector<1x8x8xbf16>,
      %128 = vector.extract_strided_slice %110 {offsets = [16, 0], sizes = [8, 8], strides = [1, 1]} : vector<32x8xbf16> to vector<8x8xbf16>
      %c2_78 = arith.constant 2 : index
      %c0_79 = arith.constant 0 : index
      %c0_80 = arith.constant 0 : index
      %129 = vector.load %arg11[%c2_78, %c0_79, %c0_80] : memref<4x8x8xbf16, #tpu.memory_space<vmem>>, vector<1x8x8xbf16>
      %130 = vector.shape_cast %129 : vector<1x8x8xbf16> to vector<8x8xbf16>
      %131 = vector.shape_cast %128 : vector<8x8xbf16> to vector<1x8x8xbf16>
      tpu.vector_store %arg11[%c2_78, %c0_79, %c0_80], %131 {strides = array<i32>} : memref<4x8x8xbf16, #tpu.memory_space<vmem>>, vector<1x8x8xbf16>,
      %132 = vector.extract_strided_slice %111 {offsets = [16, 0], sizes = [8, 8], strides = [1, 1]} : vector<32x8xbf16> to vector<8x8xbf16>
      %c2_81 = arith.constant 2 : index
      %c0_82 = arith.constant 0 : index
      %c0_83 = arith.constant 0 : index
      %133 = vector.load %arg12[%c2_81, %c0_82, %c0_83] : memref<4x8x8xbf16, #tpu.memory_space<vmem>>, vector<1x8x8xbf16>
      %134 = vector.shape_cast %133 : vector<1x8x8xbf16> to vector<8x8xbf16>
      %135 = vector.shape_cast %132 : vector<8x8xbf16> to vector<1x8x8xbf16>
      tpu.vector_store %arg12[%c2_81, %c0_82, %c0_83], %135 {strides = array<i32>} : memref<4x8x8xbf16, #tpu.memory_space<vmem>>, vector<1x8x8xbf16>,
      %136 = vector.extract_strided_slice %110 {offsets = [24, 0], sizes = [8, 8], strides = [1, 1]} : vector<32x8xbf16> to vector<8x8xbf16>
      %c3_84 = arith.constant 3 : index
      %c0_85 = arith.constant 0 : index
      %c0_86 = arith.constant 0 : index
      %137 = vector.load %arg11[%c3_84, %c0_85, %c0_86] : memref<4x8x8xbf16, #tpu.memory_space<vmem>>, vector<1x8x8xbf16>
      %138 = vector.shape_cast %137 : vector<1x8x8xbf16> to vector<8x8xbf16>
      %139 = vector.shape_cast %136 : vector<8x8xbf16> to vector<1x8x8xbf16>
      tpu.vector_store %arg11[%c3_84, %c0_85, %c0_86], %139 {strides = array<i32>} : memref<4x8x8xbf16, #tpu.memory_space<vmem>>, vector<1x8x8xbf16>,
      %140 = vector.extract_strided_slice %111 {offsets = [24, 0], sizes = [8, 8], strides = [1, 1]} : vector<32x8xbf16> to vector<8x8xbf16>
      %c3_87 = arith.constant 3 : index
      %c0_88 = arith.constant 0 : index
      %c0_89 = arith.constant 0 : index
      %141 = vector.load %arg12[%c3_87, %c0_88, %c0_89] : memref<4x8x8xbf16, #tpu.memory_space<vmem>>, vector<1x8x8xbf16>
      %142 = vector.shape_cast %141 : vector<1x8x8xbf16> to vector<8x8xbf16>
      %143 = vector.shape_cast %140 : vector<8x8xbf16> to vector<1x8x8xbf16>
      tpu.vector_store %arg12[%c3_87, %c0_88, %c0_89], %143 {strides = array<i32>} : memref<4x8x8xbf16, #tpu.memory_space<vmem>>, vector<1x8x8xbf16>,
    } else {
    }
    %c8_i32 = arith.constant 8 : i32
    %3 = arith.muli %arg2, %c8_i32 : i32
    %4 = tpu.assume_multiple %3, 8 : i32
    %c0 = arith.constant 0 : index
    %5 = arith.index_cast %4 : i32 to index
    %c0_1 = arith.constant 0 : index
    %6 = vector.load %arg3[%c0, %5, %c0_1] : memref<1x8x32xbf16, #tpu.memory_space<vmem>>, vector<1x8x32xbf16>
    %7 = vector.shape_cast %6 : vector<1x8x32xbf16> to vector<8x32xbf16>
    %c0_2 = arith.constant 0 : index
    %c0_3 = arith.constant 0 : index
    %c0_4 = arith.constant 0 : index
    %8 = vector.load %arg4[%c0_2, %c0_3, %c0_4] : memref<1x32x32xbf16, #tpu.memory_space<vmem>>, vector<1x32x32xbf16>
    %9 = vector.shape_cast %8 : vector<1x32x32xbf16> to vector<32x32xbf16>
    %cst = arith.constant dense<0.000000e+00> : vector<8x32xf32>
    %10 = tpu.matmul %7, %9, %cst {dimension_numbers = #tpu.dot_dimension_numbers<[1], [1], [0], [0], [0, 0, 1, 0], [], []>} : vector<8x32xbf16>, vector<32x32xbf16>, vector<8x32xf32> -> vector<8x32xf32>
    %c0_5 = arith.constant 0 : index
    %c0_6 = arith.constant 0 : index
    %c0_7 = arith.constant 0 : index
    %11 = vector.load %arg5[%c0_5, %c0_6, %c0_7] : memref<1x1x32xf32, #tpu.memory_space<vmem>>, vector<1x1x32xf32>
    %12 = vector.shape_cast %11 : vector<1x1x32xf32> to vector<1x32xf32>
    %13 = vector.broadcast %12 : vector<1x32xf32> to vector<8x32xf32>
    %14 = arith.addf %10, %13 : vector<8x32xf32>
    %cst_8 = arith.constant 0.353553385 : f32
    %15 = vector.broadcast %cst_8 : f32 to vector<8x32xf32>
    %16 = arith.mulf %14, %15 : vector<8x32xf32>
    %17 = arith.truncf %16 : vector<8x32xf32> to vector<8x32xbf16>
    %18 = vector.extract_strided_slice %17 {offsets = [0, 0], sizes = [8, 8], strides = [1, 1]} : vector<8x32xbf16> to vector<8x8xbf16>
    %c0_9 = arith.constant 0 : index
    %c0_10 = arith.constant 0 : index
    %c0_11 = arith.constant 0 : index
    %19 = vector.load %arg11[%c0_9, %c0_10, %c0_11] : memref<4x8x8xbf16, #tpu.memory_space<vmem>>, vector<1x8x8xbf16>
    %20 = vector.shape_cast %19 : vector<1x8x8xbf16> to vector<8x8xbf16>
    %cst_12 = arith.constant dense<0.000000e+00> : vector<8x8xf32>
    %21 = tpu.matmul %18, %20, %cst_12 {dimension_numbers = #tpu.dot_dimension_numbers<[1], [0], [0], [1], [0, 0, 1, 1], [], []>} : vector<8x8xbf16>, vector<8x8xbf16>, vector<8x8xf32> -> vector<8x8xf32>
    %cst_13 = arith.constant dense<0xFF800000> : vector<8xf32>
    %22 = vector.multi_reduction <maximumf>, %21, %cst_13 [1] : vector<8x8xf32> to vector<8xf32>
    %23 = vector.shape_cast %22 : vector<8xf32> to vector<8x1xf32>
    %24 = vector.broadcast %23 : vector<8x1xf32> to vector<8x8xf32>
    %25 = arith.subf %21, %24 : vector<8x8xf32>
    %26 = math.exp %25 : vector<8x8xf32>
    %cst_14 = arith.constant dense<0.000000e+00> : vector<8xf32>
    %27 = vector.multi_reduction <add>, %26, %cst_14 [1] : vector<8x8xf32> to vector<8xf32>
    %28 = vector.shape_cast %27 : vector<8xf32> to vector<8x1xf32>
    %29 = arith.truncf %26 : vector<8x8xf32> to vector<8x8xbf16>
    %c0_15 = arith.constant 0 : index
    %c0_16 = arith.constant 0 : index
    %c0_17 = arith.constant 0 : index
    %30 = vector.load %arg12[%c0_15, %c0_16, %c0_17] : memref<4x8x8xbf16, #tpu.memory_space<vmem>>, vector<1x8x8xbf16>
    %31 = vector.shape_cast %30 : vector<1x8x8xbf16> to vector<8x8xbf16>
    %cst_18 = arith.constant dense<0.000000e+00> : vector<8x8xf32>
    %32 = tpu.matmul %29, %31, %cst_18 {dimension_numbers = #tpu.dot_dimension_numbers<[1], [1], [0], [0], [0, 0, 1, 0], [], []>} : vector<8x8xbf16>, vector<8x8xbf16>, vector<8x8xf32> -> vector<8x8xf32>
    %33 = tpu.reciprocal %28 {approx = true} : vector<8x1xf32> -> vector<8x1xf32>
    %34 = vector.broadcast %33 : vector<8x1xf32> to vector<8x8xf32>
    %35 = arith.mulf %32, %34 : vector<8x8xf32>
    %36 = vector.extract_strided_slice %17 {offsets = [0, 8], sizes = [8, 8], strides = [1, 1]} : vector<8x32xbf16> to vector<8x8xbf16>
    %c1 = arith.constant 1 : index
    %c0_19 = arith.constant 0 : index
    %c0_20 = arith.constant 0 : index
    %37 = vector.load %arg11[%c1, %c0_19, %c0_20] : memref<4x8x8xbf16, #tpu.memory_space<vmem>>, vector<1x8x8xbf16>
    %38 = vector.shape_cast %37 : vector<1x8x8xbf16> to vector<8x8xbf16>
    %cst_21 = arith.constant dense<0.000000e+00> : vector<8x8xf32>
    %39 = tpu.matmul %36, %38, %cst_21 {dimension_numbers = #tpu.dot_dimension_numbers<[1], [0], [0], [1], [0, 0, 1, 1], [], []>} : vector<8x8xbf16>, vector<8x8xbf16>, vector<8x8xf32> -> vector<8x8xf32>
    %cst_22 = arith.constant dense<0xFF800000> : vector<8xf32>
    %40 = vector.multi_reduction <maximumf>, %39, %cst_22 [1] : vector<8x8xf32> to vector<8xf32>
    %41 = vector.shape_cast %40 : vector<8xf32> to vector<8x1xf32>
    %42 = vector.broadcast %41 : vector<8x1xf32> to vector<8x8xf32>
    %43 = arith.subf %39, %42 : vector<8x8xf32>
    %44 = math.exp %43 : vector<8x8xf32>
    %cst_23 = arith.constant dense<0.000000e+00> : vector<8xf32>
    %45 = vector.multi_reduction <add>, %44, %cst_23 [1] : vector<8x8xf32> to vector<8xf32>
    %46 = vector.shape_cast %45 : vector<8xf32> to vector<8x1xf32>
    %47 = arith.truncf %44 : vector<8x8xf32> to vector<8x8xbf16>
    %c1_24 = arith.constant 1 : index
    %c0_25 = arith.constant 0 : index
    %c0_26 = arith.constant 0 : index
    %48 = vector.load %arg12[%c1_24, %c0_25, %c0_26] : memref<4x8x8xbf16, #tpu.memory_space<vmem>>, vector<1x8x8xbf16>
    %49 = vector.shape_cast %48 : vector<1x8x8xbf16> to vector<8x8xbf16>
    %cst_27 = arith.constant dense<0.000000e+00> : vector<8x8xf32>
    %50 = tpu.matmul %47, %49, %cst_27 {dimension_numbers = #tpu.dot_dimension_numbers<[1], [1], [0], [0], [0, 0, 1, 0], [], []>} : vector<8x8xbf16>, vector<8x8xbf16>, vector<8x8xf32> -> vector<8x8xf32>
    %51 = tpu.reciprocal %46 {approx = true} : vector<8x1xf32> -> vector<8x1xf32>
    %52 = vector.broadcast %51 : vector<8x1xf32> to vector<8x8xf32>
    %53 = arith.mulf %50, %52 : vector<8x8xf32>
    %54 = vector.extract_strided_slice %17 {offsets = [0, 16], sizes = [8, 8], strides = [1, 1]} : vector<8x32xbf16> to vector<8x8xbf16>
    %c2 = arith.constant 2 : index
    %c0_28 = arith.constant 0 : index
    %c0_29 = arith.constant 0 : index
    %55 = vector.load %arg11[%c2, %c0_28, %c0_29] : memref<4x8x8xbf16, #tpu.memory_space<vmem>>, vector<1x8x8xbf16>
    %56 = vector.shape_cast %55 : vector<1x8x8xbf16> to vector<8x8xbf16>
    %cst_30 = arith.constant dense<0.000000e+00> : vector<8x8xf32>
    %57 = tpu.matmul %54, %56, %cst_30 {dimension_numbers = #tpu.dot_dimension_numbers<[1], [0], [0], [1], [0, 0, 1, 1], [], []>} : vector<8x8xbf16>, vector<8x8xbf16>, vector<8x8xf32> -> vector<8x8xf32>
    %cst_31 = arith.constant dense<0xFF800000> : vector<8xf32>
    %58 = vector.multi_reduction <maximumf>, %57, %cst_31 [1] : vector<8x8xf32> to vector<8xf32>
    %59 = vector.shape_cast %58 : vector<8xf32> to vector<8x1xf32>
    %60 = vector.broadcast %59 : vector<8x1xf32> to vector<8x8xf32>
    %61 = arith.subf %57, %60 : vector<8x8xf32>
    %62 = math.exp %61 : vector<8x8xf32>
    %cst_32 = arith.constant dense<0.000000e+00> : vector<8xf32>
    %63 = vector.multi_reduction <add>, %62, %cst_32 [1] : vector<8x8xf32> to vector<8xf32>
    %64 = vector.shape_cast %63 : vector<8xf32> to vector<8x1xf32>
    %65 = arith.truncf %62 : vector<8x8xf32> to vector<8x8xbf16>
    %c2_33 = arith.constant 2 : index
    %c0_34 = arith.constant 0 : index
    %c0_35 = arith.constant 0 : index
    %66 = vector.load %arg12[%c2_33, %c0_34, %c0_35] : memref<4x8x8xbf16, #tpu.memory_space<vmem>>, vector<1x8x8xbf16>
    %67 = vector.shape_cast %66 : vector<1x8x8xbf16> to vector<8x8xbf16>
    %cst_36 = arith.constant dense<0.000000e+00> : vector<8x8xf32>
    %68 = tpu.matmul %65, %67, %cst_36 {dimension_numbers = #tpu.dot_dimension_numbers<[1], [1], [0], [0], [0, 0, 1, 0], [], []>} : vector<8x8xbf16>, vector<8x8xbf16>, vector<8x8xf32> -> vector<8x8xf32>
    %69 = tpu.reciprocal %64 {approx = true} : vector<8x1xf32> -> vector<8x1xf32>
    %70 = vector.broadcast %69 : vector<8x1xf32> to vector<8x8xf32>
    %71 = arith.mulf %68, %70 : vector<8x8xf32>
    %72 = vector.extract_strided_slice %17 {offsets = [0, 24], sizes = [8, 8], strides = [1, 1]} : vector<8x32xbf16> to vector<8x8xbf16>
    %c3 = arith.constant 3 : index
    %c0_37 = arith.constant 0 : index
    %c0_38 = arith.constant 0 : index
    %73 = vector.load %arg11[%c3, %c0_37, %c0_38] : memref<4x8x8xbf16, #tpu.memory_space<vmem>>, vector<1x8x8xbf16>
    %74 = vector.shape_cast %73 : vector<1x8x8xbf16> to vector<8x8xbf16>
    %cst_39 = arith.constant dense<0.000000e+00> : vector<8x8xf32>
    %75 = tpu.matmul %72, %74, %cst_39 {dimension_numbers = #tpu.dot_dimension_numbers<[1], [0], [0], [1], [0, 0, 1, 1], [], []>} : vector<8x8xbf16>, vector<8x8xbf16>, vector<8x8xf32> -> vector<8x8xf32>
    %cst_40 = arith.constant dense<0xFF800000> : vector<8xf32>
    %76 = vector.multi_reduction <maximumf>, %75, %cst_40 [1] : vector<8x8xf32> to vector<8xf32>
    %77 = vector.shape_cast %76 : vector<8xf32> to vector<8x1xf32>
    %78 = vector.broadcast %77 : vector<8x1xf32> to vector<8x8xf32>
    %79 = arith.subf %75, %78 : vector<8x8xf32>
    %80 = math.exp %79 : vector<8x8xf32>
    %cst_41 = arith.constant dense<0.000000e+00> : vector<8xf32>
    %81 = vector.multi_reduction <add>, %80, %cst_41 [1] : vector<8x8xf32> to vector<8xf32>
    %82 = vector.shape_cast %81 : vector<8xf32> to vector<8x1xf32>
    %83 = arith.truncf %80 : vector<8x8xf32> to vector<8x8xbf16>
    %c3_42 = arith.constant 3 : index
    %c0_43 = arith.constant 0 : index
    %c0_44 = arith.constant 0 : index
    %84 = vector.load %arg12[%c3_42, %c0_43, %c0_44] : memref<4x8x8xbf16, #tpu.memory_space<vmem>>, vector<1x8x8xbf16>
    %85 = vector.shape_cast %84 : vector<1x8x8xbf16> to vector<8x8xbf16>
    %cst_45 = arith.constant dense<0.000000e+00> : vector<8x8xf32>
    %86 = tpu.matmul %83, %85, %cst_45 {dimension_numbers = #tpu.dot_dimension_numbers<[1], [1], [0], [0], [0, 0, 1, 0], [], []>} : vector<8x8xbf16>, vector<8x8xbf16>, vector<8x8xf32> -> vector<8x8xf32>
    %87 = tpu.reciprocal %82 {approx = true} : vector<8x1xf32> -> vector<8x1xf32>
    %88 = vector.broadcast %87 : vector<8x1xf32> to vector<8x8xf32>
    %89 = arith.mulf %86, %88 : vector<8x8xf32>
    %90 = tpu.concatenate %35, %53, %71, %89 in 1 : vector<8x8xf32>, vector<8x8xf32>, vector<8x8xf32>, vector<8x8xf32> -> vector<8x32xf32>
    %c0_46 = arith.constant 0 : index
    %c0_47 = arith.constant 0 : index
    %c0_48 = arith.constant 0 : index
    %91 = vector.load %arg10[%c0_46, %c0_47, %c0_48] : memref<1x8x32xf32, #tpu.memory_space<vmem>>, vector<1x8x32xf32>
    %92 = vector.shape_cast %91 : vector<1x8x32xf32> to vector<8x32xf32>
    %93 = vector.shape_cast %90 : vector<8x32xf32> to vector<1x8x32xf32>
    tpu.vector_store %arg10[%c0_46, %c0_47, %c0_48], %93 {strides = array<i32>} : memref<1x8x32xf32, #tpu.memory_space<vmem>>, vector<1x8x32xf32>,
    return
  }
  func.func @transform_0(%arg0: i32, %arg1: i32, %arg2: i32) -> (i32, i32, i32) {
    %c0_i32 = arith.constant 0 : i32
    %c0_i32_0 = arith.constant 0 : i32
    %c0_i32_1 = arith.constant 0 : i32
    return %arg0, %c0_i32, %c0_i32_0 : i32, i32, i32
  }
  func.func @transform_1(%arg0: i32, %arg1: i32, %arg2: i32) -> (i32, i32, i32) {
    %c0_i32 = arith.constant 0 : i32
    %c0_i32_0 = arith.constant 0 : i32
    %c0_i32_1 = arith.constant 0 : i32
    return %arg1, %c0_i32, %c0_i32_0 : i32, i32, i32
  }
  func.func @transform_2(%arg0: i32, %arg1: i32, %arg2: i32) -> (i32, i32, i32) {
    %c0_i32 = arith.constant 0 : i32
    %c0_i32_0 = arith.constant 0 : i32
    %c0_i32_1 = arith.constant 0 : i32
    return %arg1, %c0_i32, %c0_i32_0 : i32, i32, i32
  }
  func.func @transform_3(%arg0: i32, %arg1: i32, %arg2: i32) -> (i32, i32, i32) {
    %c0_i32 = arith.constant 0 : i32
    %c0_i32_0 = arith.constant 0 : i32
    %c0_i32_1 = arith.constant 0 : i32
    return %arg1, %c0_i32, %c0_i32_0 : i32, i32, i32
  }
  func.func @transform_4(%arg0: i32, %arg1: i32, %arg2: i32) -> (i32, i32, i32) {
    %c0_i32 = arith.constant 0 : i32
    %c0_i32_0 = arith.constant 0 : i32
    %c0_i32_1 = arith.constant 0 : i32
    return %arg1, %c0_i32, %c0_i32_0 : i32, i32, i32
  }
  func.func @transform_5(%arg0: i32, %arg1: i32, %arg2: i32) -> (i32, i32, i32) {
    %c0_i32 = arith.constant 0 : i32
    %c0_i32_0 = arith.constant 0 : i32
    %c0_i32_1 = arith.constant 0 : i32
    return %arg1, %c0_i32, %c0_i32_0 : i32, i32, i32
  }
  func.func @transform_6(%arg0: i32, %arg1: i32, %arg2: i32) -> (i32, i32, i32) {
    %c0_i32 = arith.constant 0 : i32
    %c0_i32_0 = arith.constant 0 : i32
    %c0_i32_1 = arith.constant 0 : i32
    return %arg1, %c0_i32, %c0_i32_0 : i32, i32, i32
  }
  func.func @transform_7(%arg0: i32, %arg1: i32, %arg2: i32) -> (i32, i32, i32) {
    %c0_i32 = arith.constant 0 : i32
    return %arg0, %arg2, %arg1 : i32, i32, i32
  }
}

</mosaic_0001>

<llo_original>
// kernel: tpu_custom_call.1
$region0: #{tpu_custom_call.1}
  #allocation0 [shape = 'u32[]', space=smem, size = 0x4, offset = 0x4, fixed_abs, tag = 'smem constant byte address 0x4 - core index']
  #allocation1 [shape = 'u32[144,128]{1,0:T(1,128)}', space=vmem, size = 0x12000, scoped, tag = 'internal scratch']
  #allocation2 [shape = 'bf16[4,8,8]{2,1,0:T(8,128)(2,1)}', space=vmem, size = 0x2000, scoped, tag = 'scratch operand']
  #allocation3 [shape = 'bf16[4,8,8]{2,1,0:T(8,128)(2,1)}', space=vmem, size = 0x2000, scoped, tag = 'scratch operand']
  %s0 = inlined_call_operand.vmem [shape: bf16[2,8,32], index: 0, kind: input, shape index: {}]
  %s1 = inlined_call_operand.vmem [shape: bf16[1,32,32], index: 1, kind: input, shape index: {}]
  %s2 = inlined_call_operand.vmem [shape: f32[1,1,32], index: 2, kind: input, shape index: {}]
  %s3 = inlined_call_operand.vmem [shape: bf16[1,32,32], index: 3, kind: input, shape index: {}]
  %s4 = inlined_call_operand.vmem [shape: f32[1,32,1], index: 4, kind: input, shape index: {}]
  %s5 = inlined_call_operand.vmem [shape: bf16[1,32,32], index: 5, kind: input, shape index: {}]
  %s6 = inlined_call_operand.vmem [shape: f32[1,32,1], index: 6, kind: input, shape index: {}]
  %s7 = inlined_call_operand.hbm [shape: f32[2,8,32], index: 7, kind: output, shape index: {}]
  %s8 = sld [smem:[#allocation0]]
  $region65: #{tpu_custom_call.1} parent=0
    _
  %s10 = ssub.s32 1, %s8
  %s11 = scalar_select 0, %s10, %s8
  $region1: #{tpu_custom_call.1} parent=0
    #allocation4 [shape = 'u8[8192]{0}', space=vmem, size = 0x2000, scoped, tag = 'output window, operand 0']
    #allocation5 [shape = 's32[2]{0}', space=sflag, size = 0x8, scoped, tag = 'scoped memory for tpu_custom_call.1']
    %12 = vsyncpa [#allocation5], 0
    %s13 = scalar_lea.sflag [#allocation5], 1
    %14 = vsyncpa %s13, 0
    loop: start=0, step=1, limit=4
    $region2: #{tpu_custom_call.1} parent=1 // loop_pre_header
      _
    $region3: #{tpu_custom_call.1} parent=1 // loop_header
      %s16 = sphi 0, %s20
      %p17 = scmp.ge.s32.totalorder %s16, 4
      %s23 = sphi 0, %s42
      %s24 = sphi 0, %s38
      %s25 = sphi 0, %s34
      %s26 = sphi 0, %s23
      %s27 = sphi 0, %s24
      %s28 = sphi 0, %s25
      %s29 = sphi 0, %s26
      %s30 = sphi 0, %s27
      %s31 = sphi 0, %s28
      %s45 = sphi 0, %s47
      %s48 = sphi 0, %s45
      %s49 = sphi 0, %s48
      %s65 = sphi 0, %s49
      %s71 = sphi 0, %s73
      %s74 = sphi 0, %s71
      %s75 = sphi 0, %s74
      %s91 = sphi 0, %s75
      %s97 = sphi 0, %s99
      %s100 = sphi 0, %s97
      %s101 = sphi 0, %s100
      %s117 = sphi 0, %s101
      %s123 = sphi 0, %s125
      %s126 = sphi 0, %s123
      %s127 = sphi 0, %s126
      %s143 = sphi 0, %s127
      %s149 = sphi 0, %s151
      %s152 = sphi 0, %s149
      %s153 = sphi 0, %s152
      %s169 = sphi 0, %s153
      %s175 = sphi 0, %s177
      %s178 = sphi 0, %s175
      %s179 = sphi 0, %s178
      %s195 = sphi 0, %s179
      %s201 = sphi 0, %s203
      %s204 = sphi 0, %s201
      %s205 = sphi 0, %s204
      %s221 = sphi 0, %s205
      %s231 = sphi 0, %s233
      %s234 = sphi 0, %s231
      %s235 = sphi 0, %s234
      %s251 = sphi 0, %s235
    $region4: #{tpu_custom_call.1} parent=1 // loop_header_branch
      %19 = sbr.rel (%p17) target = $region8
    $region5: #{tpu_custom_call.1} parent=1 // loop_body
      %s21 = ssub.s32 %s16, 1
      %s22 = ssub.s32 %s16, 2
      %s32 = sadd.s32 1, %s25
      %p33 = scmp.ge.s32.totalorder %s32, 1
      %s34 = scalar_select %p33, 0, %s32
      %s35 = sadd.s32 1, %s24
      %s36 = scalar_select %p33, %s35, %s24
      %p37 = scmp.ge.s32.totalorder %s36, 1
      %s38 = scalar_select %p37, 0, %s36
      %s39 = sadd.s32 1, %s23
      %s40 = scalar_select %p37, %s39, %s23
      %p41 = scmp.ge.s32.totalorder %s40, 2
      %s42 = scalar_select %p41, 0, %s40
      %s43 = ssub.s32 %s23, %s42
      %p44 = scmp.eq.s32.totalorder %s43, 0
      %s46 = sadd.s32 %s45, 1
      %s47 = scalar_select %p44, %s45, %s46
      %p50 = pneg %p44
      %p51 = scmp.eq.s32.totalorder %s16, 1
      %p52 = por %p50, %p51
      %p53 = scmp.ne.s32.totalorder %s45, %s48
      %p54 = scmp.eq.s32.totalorder %s16, 0
      %p55 = por %p53, %p54
      %p56 = scmp.ne.s32.totalorder %s45, %s48
      %p57 = scmp.eq.s32.totalorder %s21, 1
      %p58 = por %p56, %p57
      %p59 = scmp.ne.s32.totalorder %s48, %s49
      %p60 = scmp.eq.s32.totalorder %s21, 0
      %p61 = por %p59, %p60
      %p62 = scmp.ne.s32.totalorder %s48, %s49
      %p63 = scmp.eq.s32.totalorder %s22, 1
      %p64 = por %p62, %p63
      %p66 = scmp.ne.s32.totalorder %s49, %s65
      %p67 = scmp.eq.s32.totalorder %s22, 0
      %p68 = por %p66, %p67
      %s69 = ssub.s32 %s24, %s38
      %p70 = scmp.eq.s32.totalorder %s69, 0
      %s72 = sadd.s32 %s71, 1
      %s73 = scalar_select %p70, %s71, %s72
      %p76 = pneg %p70
      %p77 = scmp.eq.s32.totalorder %s16, 1
      %p78 = por %p76, %p77
      %p79 = scmp.ne.s32.totalorder %s71, %s74
      %p80 = scmp.eq.s32.totalorder %s16, 0
      %p81 = por %p79, %p80
      %p82 = scmp.ne.s32.totalorder %s71, %s74
      %p83 = scmp.eq.s32.totalorder %s21, 1
      %p84 = por %p82, %p83
      %p85 = scmp.ne.s32.totalorder %s74, %s75
      %p86 = scmp.eq.s32.totalorder %s21, 0
      %p87 = por %p85, %p86
      %p88 = scmp.ne.s32.totalorder %s74, %s75
      %p89 = scmp.eq.s32.totalorder %s22, 1
      %p90 = por %p88, %p89
      %p92 = scmp.ne.s32.totalorder %s75, %s91
      %p93 = scmp.eq.s32.totalorder %s22, 0
      %p94 = por %p92, %p93
      %s95 = ssub.s32 %s24, %s38
      %p96 = scmp.eq.s32.totalorder %s95, 0
      %s98 = sadd.s32 %s97, 1
      %s99 = scalar_select %p96, %s97, %s98
      %p102 = pneg %p96
      %p103 = scmp.eq.s32.totalorder %s16, 1
      %p104 = por %p102, %p103
      %p105 = scmp.ne.s32.totalorder %s97, %s100
      %p106 = scmp.eq.s32.totalorder %s16, 0
      %p107 = por %p105, %p106
      %p108 = scmp.ne.s32.totalorder %s97, %s100
      %p109 = scmp.eq.s32.totalorder %s21, 1
      %p110 = por %p108, %p109
      %p111 = scmp.ne.s32.totalorder %s100, %s101
      %p112 = scmp.eq.s32.totalorder %s21, 0
      %p113 = por %p111, %p112
      %p114 = scmp.ne.s32.totalorder %s100, %s101
      %p115 = scmp.eq.s32.totalorder %s22, 1
      %p116 = por %p114, %p115
      %p118 = scmp.ne.s32.totalorder %s101, %s117
      %p119 = scmp.eq.s32.totalorder %s22, 0
      %p120 = por %p118, %p119
      %s121 = ssub.s32 %s24, %s38
      %p122 = scmp.eq.s32.totalorder %s121, 0
      %s124 = sadd.s32 %s123, 1
      %s125 = scalar_select %p122, %s123, %s124
      %p128 = pneg %p122
      %p129 = scmp.eq.s32.totalorder %s16, 1
      %p130 = por %p128, %p129
      %p131 = scmp.ne.s32.totalorder %s123, %s126
      %p132 = scmp.eq.s32.totalorder %s16, 0
      %p133 = por %p131, %p132
      %p134 = scmp.ne.s32.totalorder %s123, %s126
      %p135 = scmp.eq.s32.totalorder %s21, 1
      %p136 = por %p134, %p135
      %p137 = scmp.ne.s32.totalorder %s126, %s127
      %p138 = scmp.eq.s32.totalorder %s21, 0
      %p139 = por %p137, %p138
      %p140 = scmp.ne.s32.totalorder %s126, %s127
      %p141 = scmp.eq.s32.totalorder %s22, 1
      %p142 = por %p140, %p141
      %p144 = scmp.ne.s32.totalorder %s127, %s143
      %p145 = scmp.eq.s32.totalorder %s22, 0
      %p146 = por %p144, %p145
      %s147 = ssub.s32 %s24, %s38
      %p148 = scmp.eq.s32.totalorder %s147, 0
      %s150 = sadd.s32 %s149, 1
      %s151 = scalar_select %p148, %s149, %s150
      %p154 = pneg %p148
      %p155 = scmp.eq.s32.totalorder %s16, 1
      %p156 = por %p154, %p155
      %p157 = scmp.ne.s32.totalorder %s149, %s152
      %p158 = scmp.eq.s32.totalorder %s16, 0
      %p159 = por %p157, %p158
      %p160 = scmp.ne.s32.totalorder %s149, %s152
      %p161 = scmp.eq.s32.totalorder %s21, 1
      %p162 = por %p160, %p161
      %p163 = scmp.ne.s32.totalorder %s152, %s153
      %p164 = scmp.eq.s32.totalorder %s21, 0
      %p165 = por %p163, %p164
      %p166 = scmp.ne.s32.totalorder %s152, %s153
      %p167 = scmp.eq.s32.totalorder %s22, 1
      %p168 = por %p166, %p167
      %p170 = scmp.ne.s32.totalorder %s153, %s169
      %p171 = scmp.eq.s32.totalorder %s22, 0
      %p172 = por %p170, %p171
      %s173 = ssub.s32 %s24, %s38
      %p174 = scmp.eq.s32.totalorder %s173, 0
      %s176 = sadd.s32 %s175, 1
      %s177 = scalar_select %p174, %s175, %s176
      %p180 = pneg %p174
      %p181 = scmp.eq.s32.totalorder %s16, 1
      %p182 = por %p180, %p181
      %p183 = scmp.ne.s32.totalorder %s175, %s178
      %p184 = scmp.eq.s32.totalorder %s16, 0
      %p185 = por %p183, %p184
      %p186 = scmp.ne.s32.totalorder %s175, %s178
      %p187 = scmp.eq.s32.totalorder %s21, 1
      %p188 = por %p186, %p187
      %p189 = scmp.ne.s32.totalorder %s178, %s179
      %p190 = scmp.eq.s32.totalorder %s21, 0
      %p191 = por %p189, %p190
      %p192 = scmp.ne.s32.totalorder %s178, %s179
      %p193 = scmp.eq.s32.totalorder %s22, 1
      %p194 = por %p192, %p193
      %p196 = scmp.ne.s32.totalorder %s179, %s195
      %p197 = scmp.eq.s32.totalorder %s22, 0
      %p198 = por %p196, %p197
      %s199 = ssub.s32 %s24, %s38
      %p200 = scmp.eq.s32.totalorder %s199, 0
      %s202 = sadd.s32 %s201, 1
      %s203 = scalar_select %p200, %s201, %s202
      %p206 = pneg %p200
      %p207 = scmp.eq.s32.totalorder %s16, 1
      %p208 = por %p206, %p207
      %p209 = scmp.ne.s32.totalorder %s201, %s204
      %p210 = scmp.eq.s32.totalorder %s16, 0
      %p211 = por %p209, %p210
      %p212 = scmp.ne.s32.totalorder %s201, %s204
      %p213 = scmp.eq.s32.totalorder %s21, 1
      %p214 = por %p212, %p213
      %p215 = scmp.ne.s32.totalorder %s204, %s205
      %p216 = scmp.eq.s32.totalorder %s21, 0
      %p217 = por %p215, %p216
      %p218 = scmp.ne.s32.totalorder %s204, %s205
      %p219 = scmp.eq.s32.totalorder %s22, 1
      %p220 = por %p218, %p219
      %p222 = scmp.ne.s32.totalorder %s205, %s221
      %p223 = scmp.eq.s32.totalorder %s22, 0
      %p224 = por %p222, %p223
      %s225 = ssub.s32 %s23, %s42
      %s226 = ssub.s32 %s25, %s34
      %s227 = sor.u32 %s225, %s226
      %s228 = ssub.s32 %s24, %s38
      %s229 = sor.u32 %s227, %s228
      %p230 = scmp.eq.s32.totalorder %s229, 0
      %s232 = sadd.s32 %s231, 1
      %s233 = scalar_select %p230, %s231, %s232
      %p236 = pneg %p230
      %p237 = scmp.eq.s32.totalorder %s16, 1
      %p238 = por %p236, %p237
      %p239 = scmp.ne.s32.totalorder %s231, %s234
      %p240 = scmp.eq.s32.totalorder %s16, 0
      %p241 = por %p239, %p240
      %p242 = scmp.ne.s32.totalorder %s231, %s234
      %p243 = scmp.eq.s32.totalorder %s21, 1
      %p244 = por %p242, %p243
      %p245 = scmp.ne.s32.totalorder %s234, %s235
      %p246 = scmp.eq.s32.totalorder %s21, 0
      %p247 = por %p245, %p246
      %p248 = scmp.ne.s32.totalorder %s234, %s235
      %p249 = scmp.eq.s32.totalorder %s22, 1
      %p250 = por %p248, %p249
      %p252 = scmp.ne.s32.totalorder %s235, %s251
      %p253 = scmp.eq.s32.totalorder %s22, 0
      %p254 = por %p252, %p253
      %p255 = scmp.le.s32.totalorder 1, %s16
      %p256 = scmp.lt.s32.totalorder %s16, 3
      %p257 = pnand %p255, %p256
      %p258 = pneg %p257
      // Predicated region
      $region9: #{tpu_custom_call.1} parent=5 // pred_check
        _
      $region10: #{tpu_custom_call.1} parent=5 // pred_check_branch
        %260 = sbr.rel (%p257) target = $region12
      $region11: #{tpu_custom_call.1} parent=5 // pred_region
        %s261 = ssub.s32 %s16, 1
        // Predicated region
        $region13: #{tpu_custom_call.1} parent=11 // pred_check
          %p262 = pneg %p87
        $region14: #{tpu_custom_call.1} parent=11 // pred_check_branch
          %264 = sbr.rel (%p262) target = $region16
        $region15: #{tpu_custom_call.1} parent=11 // pred_region
          %p265 = scmp.lt.s32.totalorder %s27, 0
          %s266 = scalar_select %p265, %s27, 0
          %s267 = smul.addr %s266, 4
          %s268 = smul.addr %s267, 4
          %s269 = scalar_lea.vmem %s1, %s268
        $region16: #{tpu_custom_call.1} parent=11 // pred_fallthru
          _
        // Predicated region
        $region17: #{tpu_custom_call.1} parent=11 // pred_check
          %p270 = pneg %p113
        $region18: #{tpu_custom_call.1} parent=11 // pred_check_branch
          %272 = sbr.rel (%p270) target = $region20
        $region19: #{tpu_custom_call.1} parent=11 // pred_region
          %p273 = scmp.lt.s32.totalorder %s27, 0
          %s274 = scalar_select %p273, %s27, 0
          %s275 = scalar_lea.vmem %s2, %s274
        $region20: #{tpu_custom_call.1} parent=11 // pred_fallthru
          _
        // Predicated region
        $region21: #{tpu_custom_call.1} parent=11 // pred_check
          %p276 = pneg %p139
        $region22: #{tpu_custom_call.1} parent=11 // pred_check_branch
          %278 = sbr.rel (%p276) target = $region24
        $region23: #{tpu_custom_call.1} parent=11 // pred_region
          %p279 = scmp.lt.s32.totalorder %s27, 0
          %s280 = scalar_select %p279, %s27, 0
          %s281 = smul.addr %s280, 4
          %s282 = smul.addr %s281, 4
          %s283 = scalar_lea.vmem %s3, %s282
        $region24: #{tpu_custom_call.1} parent=11 // pred_fallthru
          _
        // Predicated region
        $region25: #{tpu_custom_call.1} parent=11 // pred_check
          %p284 = pneg %p165
        $region26: #{tpu_custom_call.1} parent=11 // pred_check_branch
          %286 = sbr.rel (%p284) target = $region28
        $region27: #{tpu_custom_call.1} parent=11 // pred_region
          %p287 = scmp.lt.s32.totalorder %s27, 0
          %s288 = scalar_select %p287, %s27, 0
          %s289 = smul.addr %s288, 4
          %s290 = smul.addr %s289, 8
          %s291 = scalar_lea.vmem %s4, %s290
        $region28: #{tpu_custom_call.1} parent=11 // pred_fallthru
          _
        // Predicated region
        $region29: #{tpu_custom_call.1} parent=11 // pred_check
          %p292 = pneg %p191
        $region30: #{tpu_custom_call.1} parent=11 // pred_check_branch
          %294 = sbr.rel (%p292) target = $region32
        $region31: #{tpu_custom_call.1} parent=11 // pred_region
          %p295 = scmp.lt.s32.totalorder %s27, 0
          %s296 = scalar_select %p295, %s27, 0
          %s297 = smul.addr %s296, 4
          %s298 = smul.addr %s297, 4
          %s299 = scalar_lea.vmem %s5, %s298
        $region32: #{tpu_custom_call.1} parent=11 // pred_fallthru
          _
        // Predicated region
        $region33: #{tpu_custom_call.1} parent=11 // pred_check
          %p300 = pneg %p217
        $region34: #{tpu_custom_call.1} parent=11 // pred_check_branch
          %302 = sbr.rel (%p300) target = $region36
        $region35: #{tpu_custom_call.1} parent=11 // pred_region
          %p303 = scmp.lt.s32.totalorder %s27, 0
          %s304 = scalar_select %p303, %s27, 0
          %s305 = smul.addr %s304, 4
          %s306 = smul.addr %s305, 8
          %s307 = scalar_lea.vmem %s6, %s306
        $region36: #{tpu_custom_call.1} parent=11 // pred_fallthru
          _
      $region12: #{tpu_custom_call.1} parent=5 // pred_fallthru
        _
      %p308 = scmp.lt.s32.totalorder %s16, 2
      // Predicated region
      $region37: #{tpu_custom_call.1} parent=5 // pred_check
        %p309 = pneg %p308
      $region38: #{tpu_custom_call.1} parent=5 // pred_check_branch
        %311 = sbr.rel (%p309) target = $region40
      $region39: #{tpu_custom_call.1} parent=5 // pred_region
        // Predicated region
        $region41: #{tpu_custom_call.1} parent=39 // pred_check
          %p312 = pneg %p55
        $region42: #{tpu_custom_call.1} parent=39 // pred_check_branch
          %314 = sbr.rel (%p312) target = $region44
        $region43: #{tpu_custom_call.1} parent=39 // pred_region
          %p315 = scmp.lt.s32.totalorder %s23, 1
          %s316 = scalar_select %p315, %s23, 1
          %s317 = smul.addr %s316, 4
          %s318 = scalar_lea.vmem %s0, %s317
        $region44: #{tpu_custom_call.1} parent=39 // pred_fallthru
          _
      $region40: #{tpu_custom_call.1} parent=5 // pred_fallthru
        _
      %p319 = scmp.le.s32.totalorder 1, %s16
      %p320 = scmp.lt.s32.totalorder %s16, 3
      %p321 = pnand %p319, %p320
      %p322 = pneg %p321
      // Predicated region
      $region45: #{tpu_custom_call.1} parent=5 // pred_check
        _
      $region46: #{tpu_custom_call.1} parent=5 // pred_check_branch
        %324 = sbr.rel (%p321) target = $region48
      $region47: #{tpu_custom_call.1} parent=5 // pred_region
        %s325 = ssub.s32 %s16, 1
        %p326 = scmp.lt.s32.totalorder %s26, 1
        %s327 = scalar_select %p326, %s26, 1
        %s328 = smul.addr %s327, 4
        %s329 = scalar_lea.vmem %s0, %s328
        %p330 = pneg %p61
        %p331 = pneg %p58
        %p332 = scmp.lt.s32.totalorder %s27, 0
        %s333 = scalar_select %p332, %s27, 0
        %s334 = smul.addr %s333, 4
        %s335 = smul.addr %s334, 4
        %s336 = scalar_lea.vmem %s1, %s335
        %p337 = pneg %p87
        %p338 = pneg %p84
        %p339 = scmp.lt.s32.totalorder %s27, 0
        %s340 = scalar_select %p339, %s27, 0
        %s341 = scalar_lea.vmem %s2, %s340
        %p342 = pneg %p113
        %p343 = pneg %p110
        %p344 = scmp.lt.s32.totalorder %s27, 0
        %s345 = scalar_select %p344, %s27, 0
        %s346 = smul.addr %s345, 4
        %s347 = smul.addr %s346, 4
        %s348 = scalar_lea.vmem %s3, %s347
        %p349 = pneg %p139
        %p350 = pneg %p136
        %p351 = scmp.lt.s32.totalorder %s27, 0
        %s352 = scalar_select %p351, %s27, 0
        %s353 = smul.addr %s352, 4
        %s354 = smul.addr %s353, 8
        %s355 = scalar_lea.vmem %s4, %s354
        %p356 = pneg %p165
        %p357 = pneg %p162
        %p358 = scmp.lt.s32.totalorder %s27, 0
        %s359 = scalar_select %p358, %s27, 0
        %s360 = smul.addr %s359, 4
        %s361 = smul.addr %s360, 4
        %s362 = scalar_lea.vmem %s5, %s361
        %p363 = pneg %p191
        %p364 = pneg %p188
        %p365 = scmp.lt.s32.totalorder %s27, 0
        %s366 = scalar_select %p365, %s27, 0
        %s367 = smul.addr %s366, 4
        %s368 = smul.addr %s367, 8
        %s369 = scalar_lea.vmem %s6, %s368
        %p370 = pneg %p217
        %p371 = pneg %p214
        %p372 = pneg %p247
        %p373 = pneg %p244
        %s374 = sand.u32 %s234, 1
        %s375 = scalar_lea.sflag [#allocation5], %s374
        %s376 = sand.u32 %s234, 1
        %s377 = smul.addr %s376, 8
        %s378 = scalar_lea.vmem [#allocation4], %s377
        %p379 = scmp.lt.s32.totalorder %s26, 1
        %s380 = scalar_select %p379, %s26, 1
        %s381 = smul.addr %s380, 4
        %s382 = scalar_lea.vmem %s0, %s381
        %p383 = scmp.lt.s32.totalorder %s27, 0
        %s384 = scalar_select %p383, %s27, 0
        %s385 = smul.addr %s384, 4
        %s386 = smul.addr %s385, 4
        %s387 = scalar_lea.vmem %s1, %s386
        %p388 = scmp.lt.s32.totalorder %s27, 0
        %s389 = scalar_select %p388, %s27, 0
        %s390 = scalar_lea.vmem %s2, %s389
        %p391 = scmp.lt.s32.totalorder %s27, 0
        %s392 = scalar_select %p391, %s27, 0
        %s393 = smul.addr %s392, 4
        %s394 = smul.addr %s393, 4
        %s395 = scalar_lea.vmem %s3, %s394
        %p396 = scmp.lt.s32.totalorder %s27, 0
        %s397 = scalar_select %p396, %s27, 0
        %s398 = smul.addr %s397, 4
        %s399 = smul.addr %s398, 8
        %s400 = scalar_lea.vmem %s4, %s399
        %p401 = scmp.lt.s32.totalorder %s27, 0
        %s402 = scalar_select %p401, %s27, 0
        %s403 = smul.addr %s402, 4
        %s404 = smul.addr %s403, 4
        %s405 = scalar_lea.vmem %s5, %s404
        %p406 = scmp.lt.s32.totalorder %s27, 0
        %s407 = scalar_select %p406, %s27, 0
        %s408 = smul.addr %s407, 4
        %s409 = smul.addr %s408, 8
        %s410 = scalar_lea.vmem %s6, %s409
        %p412 = scmp.eq.s32.totalorder %s28, 0
        // Predicated region
        $region49: #{tpu_custom_call.1} parent=47 // pred_check
          %p413 = pneg %p412
        $region50: #{tpu_custom_call.1} parent=47 // pred_check_branch
          %415 = sbr.rel (%p413) target = $region52
        $region51: #{tpu_custom_call.1} parent=47 // pred_region
          %v416 = vld [vmem:[%s382] sm:$0xf]
          %v417 = vld [vmem:[%s395] sm:$0xf]
          %v418 = vld [vmem:[%s395 + $0x4] sm:$0xf]
          %v419 = vld [vmem:[%s395 + $0x8] sm:$0xf]
          %v420 = vld [vmem:[%s395 + $0xc] sm:$0xf]
          %v421 = vld [vmem:[%s400] sm:$0xff]
          %v422 = vld [vmem:[%s400 + $0x8] sm:$0xff]
          %v423 = vld [vmem:[%s400 + $0x10] sm:$0xff]
          %v424 = vld [vmem:[%s400 + $0x18] sm:$0xff]
          %426 = vset.pattern.permute.xlu0 0
          %427 = vperm.xlu0 %426, %v421
          %v428 = vpop.permute.xlu0 %427
          %431 = vset.pattern.permute.xlu0 0
          %432 = vperm.xlu0 %431, %v422
          %v433 = vpop.permute.xlu0 %432
          %436 = vset.pattern.permute.xlu0 0
          %437 = vperm.xlu0 %436, %v423
          %v438 = vpop.permute.xlu0 %437
          %441 = vset.pattern.permute.xlu0 0
          %442 = vperm.xlu0 %441, %v424
          %v443 = vpop.permute.xlu0 %442
          %v449 = vunpack.c.l.b16 %v417
          %v450 = vunpack.c.l.b16 %v418
          %v451 = vunpack.c.l.b16 %v419
          %v452 = vunpack.c.l.b16 %v420
          %v453 = vpack.c.b16 %v450, %v449
          %v454 = vpack.c.b16 %v452, %v451
          %vm455 = vcmask 261120
          %v457 = vsel %vm455, %v453, 0
          %v460 = vsel %vm455, %v454, 0
          %v463 = vsel %vm455, %v416, 0
          %465 = vmatprep.subr.bf16.mxu0 0
          %466 = vmatpush1.bf16.xpose.msra.mxu0 0
          %467 = vmatprep.subr.bf16.mxu0 0
          %468 = vmatpush1.bf16.xpose.msra.mxu0 0
          %469 = vmatprep.subr.bf16.mxu0 0
          %470 = vmatpush1.bf16.xpose.msra.mxu0 0
          %471 = vmatprep.subr.bf16.mxu0 0
          %472 = vmatpush1.bf16.xpose.msra.mxu0 0
          %473 = vmatprep.subr.bf16.mxu0 0
          %474 = vmatpush1.bf16.xpose.msra.mxu0 0
          %475 = vmatprep.subr.bf16.mxu0 0
          %476 = vmatpush1.bf16.xpose.msra.mxu0 0
          %477 = vmatprep.subr.bf16.mxu0 0
          %478 = vmatpush1.bf16.xpose.msra.mxu0 0
          %479 = vmatprep.subr.bf16.mxu0 0
          %480 = vmatpush1.bf16.xpose.msra.mxu0 %v463
          %481 = vmatprep.subr.bf16.mxu0 0
          %482 = vmatpush2.bf16.xpose.msra.mxu0 0
          %483 = vmatprep.subr.bf16.mxu0 0
          %484 = vmatpush2.bf16.xpose.msra.mxu0 0
          %485 = vmatprep.subr.bf16.mxu0 0
          %486 = vmatpush2.bf16.xpose.msra.mxu0 0
          %487 = vmatprep.subr.bf16.mxu0 0
          %488 = vmatpush2.bf16.xpose.msra.mxu0 0
          %489 = vmatprep.subr.bf16.mxu0 0
          %490 = vmatpush2.bf16.xpose.msra.mxu0 0
          %491 = vmatprep.subr.bf16.mxu0 0
          %492 = vmatpush2.bf16.xpose.msra.mxu0 0
          %493 = vmatprep.subr.bf16.mxu0 0
          %494 = vmatpush2.bf16.xpose.msra.mxu0 0
          %495 = vmatprep.subr.bf16.mxu0 0
          %496 = vmatpush2.bf16.xpose.msra.mxu0 0
          %497 = vmatprep.mubr.bf16.mxu0 0
          %498 = vmatmul.mubr.bf16.gmra.mxu0 %v457
          %v499 = vpop.f32.mrf.mxu0
          %v500 = vadd.f32 %v428, %v499
          %v501 = vpop.f32.mrf.mxu0
          %v502 = vpop.f32.mrf.mxu0
          %v503 = vadd.f32 %v433, %v502
          %v504 = vpop.f32.mrf.mxu0
          %505 = vmatprep.mubr.bf16.mxu0 0
          %506 = vmatmul.mubr.bf16.gmra.mxu0 %v460
          %v507 = vpop.f32.mrf.mxu0
          %v508 = vadd.f32 %v438, %v507
          %v509 = vpop.f32.mrf.mxu0
          %v510 = vpop.f32.mrf.mxu0
          %v511 = vadd.f32 %v443, %v510
          %v512 = vpop.f32.mrf.mxu0
          %513 = vdwg.mxu0
          %v514 = vld [vmem:[%s405] sm:$0xf]
          %v515 = vld [vmem:[%s405 + $0x4] sm:$0xf]
          %v516 = vld [vmem:[%s405 + $0x8] sm:$0xf]
          %v517 = vld [vmem:[%s405 + $0xc] sm:$0xf]
          %v518 = vld [vmem:[%s410] sm:$0xff]
          %v519 = vld [vmem:[%s410 + $0x8] sm:$0xff]
          %v520 = vld [vmem:[%s410 + $0x10] sm:$0xff]
          %v521 = vld [vmem:[%s410 + $0x18] sm:$0xff]
          %523 = vset.pattern.permute.xlu0 0
          %524 = vperm.xlu0 %523, %v518
          %v525 = vpop.permute.xlu0 %524
          %528 = vset.pattern.permute.xlu0 0
          %529 = vperm.xlu0 %528, %v519
          %v530 = vpop.permute.xlu0 %529
          %533 = vset.pattern.permute.xlu0 0
          %534 = vperm.xlu0 %533, %v520
          %v535 = vpop.permute.xlu0 %534
          %538 = vset.pattern.permute.xlu0 0
          %539 = vperm.xlu0 %538, %v521
          %v540 = vpop.permute.xlu0 %539
          %v546 = vunpack.c.l.b16 %v514
          %v547 = vunpack.c.l.b16 %v515
          %v548 = vunpack.c.l.b16 %v516
          %v549 = vunpack.c.l.b16 %v517
          %v550 = vpack.c.b16 %v547, %v546
          %v551 = vpack.c.b16 %v549, %v548
          %v553 = vsel %vm455, %v550, 0
          %v556 = vsel %vm455, %v551, 0
          %558 = vmatprep.subr.bf16.mxu0 0
          %559 = vmatpush1.bf16.xpose.msra.mxu0 0
          %560 = vmatprep.subr.bf16.mxu0 0
          %561 = vmatpush1.bf16.xpose.msra.mxu0 0
          %562 = vmatprep.subr.bf16.mxu0 0
          %563 = vmatpush1.bf16.xpose.msra.mxu0 0
          %564 = vmatprep.subr.bf16.mxu0 0
          %565 = vmatpush1.bf16.xpose.msra.mxu0 0
          %566 = vmatprep.subr.bf16.mxu0 0
          %567 = vmatpush1.bf16.xpose.msra.mxu0 0
          %568 = vmatprep.subr.bf16.mxu0 0
          %569 = vmatpush1.bf16.xpose.msra.mxu0 0
          %570 = vmatprep.subr.bf16.mxu0 0
          %571 = vmatpush1.bf16.xpose.msra.mxu0 0
          %572 = vmatprep.subr.bf16.mxu0 0
          %573 = vmatpush1.bf16.xpose.msra.mxu0 %v463
          %574 = vmatprep.subr.bf16.mxu0 0
          %575 = vmatpush2.bf16.xpose.msra.mxu0 0
          %576 = vmatprep.subr.bf16.mxu0 0
          %577 = vmatpush2.bf16.xpose.msra.mxu0 0
          %578 = vmatprep.subr.bf16.mxu0 0
          %579 = vmatpush2.bf16.xpose.msra.mxu0 0
          %580 = vmatprep.subr.bf16.mxu0 0
          %581 = vmatpush2.bf16.xpose.msra.mxu0 0
          %582 = vmatprep.subr.bf16.mxu0 0
          %583 = vmatpush2.bf16.xpose.msra.mxu0 0
          %584 = vmatprep.subr.bf16.mxu0 0
          %585 = vmatpush2.bf16.xpose.msra.mxu0 0
          %586 = vmatprep.subr.bf16.mxu0 0
          %587 = vmatpush2.bf16.xpose.msra.mxu0 0
          %588 = vmatprep.subr.bf16.mxu0 0
          %589 = vmatpush2.bf16.xpose.msra.mxu0 0
          %590 = vmatprep.mubr.bf16.mxu0 0
          %591 = vmatmul.mubr.bf16.gmra.mxu0 %v553
          %v592 = vpop.f32.mrf.mxu0
          %v593 = vadd.f32 %v525, %v592
          %v594 = vpop.f32.mrf.mxu0
          %v595 = vpop.f32.mrf.mxu0
          %v596 = vadd.f32 %v530, %v595
          %v597 = vpop.f32.mrf.mxu0
          %598 = vmatprep.mubr.bf16.mxu0 0
          %599 = vmatmul.mubr.bf16.gmra.mxu0 %v556
          %v600 = vpop.f32.mrf.mxu0
          %v601 = vadd.f32 %v535, %v600
          %v602 = vpop.f32.mrf.mxu0
          %v603 = vpop.f32.mrf.mxu0
          %v604 = vadd.f32 %v540, %v603
          %v605 = vpop.f32.mrf.mxu0
          %606 = vdwg.mxu0
          %v607 = vpack.c.bf16 %v503, %v500
          %v608 = vpack.c.bf16 %v511, %v508
          %v609 = vpack.c.bf16 %v596, %v593
          %v610 = vpack.c.bf16 %v604, %v601
          %vm611 = vcmask 60416
          %612 = vst.msk [vmem:[#allocation2] sm:$0xf] %vm611, %v607
          %613 = vst.msk [vmem:[#allocation3] sm:$0xf] %vm611, %v609
          %v615 = vunpack.c.h.b16 %v607
          %v616 = vpack.c.b16 %v615, %v615
          %s618 = scalar_lea.vmem [#allocation2], 4
          %619 = vst.msk [vmem:[%s618] sm:$0xf] %vm611, %v616
          %v621 = vunpack.c.h.b16 %v609
          %v622 = vpack.c.b16 %v621, %v621
          %s624 = scalar_lea.vmem [#allocation3], 4
          %625 = vst.msk [vmem:[%s624] sm:$0xf] %vm611, %v622
          %s626 = scalar_lea.vmem [#allocation2], 8
          %627 = vst.msk [vmem:[%s626] sm:$0xf] %vm611, %v608
          %s628 = scalar_lea.vmem [#allocation3], 8
          %629 = vst.msk [vmem:[%s628] sm:$0xf] %vm611, %v610
          %v631 = vunpack.c.h.b16 %v608
          %v632 = vpack.c.b16 %v631, %v631
          %s634 = scalar_lea.vmem [#allocation2], 12
          %635 = vst.msk [vmem:[%s634] sm:$0xf] %vm611, %v632
          %v637 = vunpack.c.h.b16 %v610
          %v638 = vpack.c.b16 %v637, %v637
          %s640 = scalar_lea.vmem [#allocation3], 12
          %641 = vst.msk [vmem:[%s640] sm:$0xf] %vm611, %v638
        $region52: #{tpu_custom_call.1} parent=47 // pred_fallthru
          _
        %s642 = smul.u32 %s28, 8
        %s643 = sshra.s32 %s642, 3
        %s644 = sand.u32 %s642, 7
        %s645 = smul.addr %s643, 4
        %s646 = scalar_lea.vmem %s382, %s645
        %v647 = vld [vmem:[%s646] sm:$0xf]
        %v648 = vld [vmem:[%s387] sm:$0xf]
        %v649 = vld [vmem:[%s387 + $0x4] sm:$0xf]
        %v650 = vld [vmem:[%s387 + $0x8] sm:$0xf]
        %v651 = vld [vmem:[%s387 + $0xc] sm:$0xf]
        %v652 = vld [vmem:[%s390] sm:$0x1]
        %v654 = vlaneseq
        %v655 = vshrl.u32 %v654, 7
        %v656 = vsub.s32 0, %v655
        %v657 = vrot.slane %v652, %v656
        %v663 = vunpack.c.l.b16 %v648
        %v664 = vunpack.c.l.b16 %v649
        %v665 = vunpack.c.l.b16 %v650
        %v666 = vunpack.c.l.b16 %v651
        %v667 = vpack.c.b16 %v664, %v663
        %v668 = vpack.c.b16 %v666, %v665
        %vm669 = vcmask 261120
        %v671 = vsel %vm669, %v647, 0
        %v674 = vsel %vm669, %v667, 0
        %v677 = vsel %vm669, %v668, 0
        %679 = vmatprep.subr.bf16.mxu0 0
        %680 = vmatpush1.bf16.xpose.msra.mxu0 0
        %681 = vmatprep.subr.bf16.mxu0 0
        %682 = vmatpush1.bf16.xpose.msra.mxu0 0
        %683 = vmatprep.subr.bf16.mxu0 0
        %684 = vmatpush1.bf16.xpose.msra.mxu0 0
        %685 = vmatprep.subr.bf16.mxu0 0
        %686 = vmatpush1.bf16.xpose.msra.mxu0 0
        %687 = vmatprep.subr.bf16.mxu0 0
        %688 = vmatpush1.bf16.xpose.msra.mxu0 0
        %689 = vmatprep.subr.bf16.mxu0 0
        %690 = vmatpush1.bf16.xpose.msra.mxu0 0
        %691 = vmatprep.subr.bf16.mxu0 0
        %692 = vmatpush1.bf16.xpose.msra.mxu0 %v677
        %693 = vmatprep.subr.bf16.mxu0 0
        %694 = vmatpush1.bf16.xpose.msra.mxu0 %v674
        %695 = vmatprep.subr.bf16.mxu0 0
        %696 = vmatpush2.bf16.xpose.msra.mxu0 0
        %697 = vmatprep.subr.bf16.mxu0 0
        %698 = vmatpush2.bf16.xpose.msra.mxu0 0
        %699 = vmatprep.subr.bf16.mxu0 0
        %700 = vmatpush2.bf16.xpose.msra.mxu0 0
        %701 = vmatprep.subr.bf16.mxu0 0
        %702 = vmatpush2.bf16.xpose.msra.mxu0 0
        %703 = vmatprep.subr.bf16.mxu0 0
        %704 = vmatpush2.bf16.xpose.msra.mxu0 0
        %705 = vmatprep.subr.bf16.mxu0 0
        %706 = vmatpush2.bf16.xpose.msra.mxu0 0
        %707 = vmatprep.subr.bf16.mxu0 0
        %708 = vmatpush2.bf16.xpose.msra.mxu0 0
        %709 = vmatprep.subr.bf16.mxu0 0
        %710 = vmatpush2.bf16.xpose.msra.mxu0 0
        %711 = vmatprep.mubr.bf16.mxu0 0
        %712 = vmatmul.mubr.bf16.gmra.mxu0 %v671
        %v713 = vpop.f32.mrf.mxu0
        %v714 = vadd.f32 %v657, %v713
        %v715 = vpop.f32.mrf.mxu0
        %v716 = vpop.f32.mrf.mxu0
        %v717 = vpop.f32.mrf.mxu0
        %718 = vdwg.mxu0
        %v719 = vmul.f32 %v714, 0.35355338
        %v720 = vpack.c.bf16 %v719, %v719
        %v721 = vld [vmem:[#allocation2] sm:$0xf]
        %vm722 = vcmask 64512
        %v724 = vsel %vm722, %v720, 0
        %vm726 = vcmask 1043456
        %v728 = vsel %vm726, %v721, 0
        %730 = vmatprep.subr.bf16.mxu0 0
        %731 = vmatpush1.bf16.msra.mxu0 0
        %732 = vmatprep.subr.bf16.mxu0 0
        %733 = vmatpush1.bf16.msra.mxu0 0
        %734 = vmatprep.subr.bf16.mxu0 0
        %735 = vmatpush1.bf16.msra.mxu0 0
        %736 = vmatprep.subr.bf16.mxu0 0
        %737 = vmatpush1.bf16.msra.mxu0 0
        %738 = vmatprep.subr.bf16.mxu0 0
        %739 = vmatpush1.bf16.msra.mxu0 0
        %740 = vmatprep.subr.bf16.mxu0 0
        %741 = vmatpush1.bf16.msra.mxu0 0
        %742 = vmatprep.subr.bf16.mxu0 0
        %743 = vmatpush1.bf16.msra.mxu0 0
        %744 = vmatprep.subr.bf16.mxu0 0
        %745 = vmatpush1.bf16.msra.mxu0 %v728
        %746 = vmatprep.subr.bf16.mxu0 0
        %747 = vmatpush2.bf16.msra.mxu0 0
        %748 = vmatprep.subr.bf16.mxu0 0
        %749 = vmatpush2.bf16.msra.mxu0 0
        %750 = vmatprep.subr.bf16.mxu0 0
        %751 = vmatpush2.bf16.msra.mxu0 0
        %752 = vmatprep.subr.bf16.mxu0 0
        %753 = vmatpush2.bf16.msra.mxu0 0
        %754 = vmatprep.subr.bf16.mxu0 0
        %755 = vmatpush2.bf16.msra.mxu0 0
        %756 = vmatprep.subr.bf16.mxu0 0
        %757 = vmatpush2.bf16.msra.mxu0 0
        %758 = vmatprep.subr.bf16.mxu0 0
        %759 = vmatpush2.bf16.msra.mxu0 0
        %760 = vmatprep.subr.bf16.mxu0 0
        %761 = vmatpush2.bf16.msra.mxu0 0
        %762 = vmatprep.mubr.bf16.mxu0 0
        %763 = vmatmul.mubr.bf16.gmra.mxu0 %v724
        %v764 = vpop.f32.mrf.mxu0
        %v765 = vadd.f32 0.0, %v764
        %v766 = vpop.f32.mrf.mxu0
        %v767 = vpop.f32.mrf.mxu0
        %v768 = vpop.f32.mrf.mxu0
        %769 = vdwg.mxu0
        %v770 = vsel %vm722, %v765, -inf
        %771 = vmax.xlane.f32.xlu0 %v770
        %v772 = vpop.xlane.xlu0 %771
        %v773 = vsub.f32 %v765, %v772
        %v774 = vmul.f32 %v773, 1.442695
        %v775 = vpow.pop %v774
        %v776 = vsel %vm722, %v775, 0.0
        %777 = vadd.xlane.f32.xlu0 %v776
        %v778 = vpop.xlane.xlu0 %777
        %v779 = vpack.c.bf16 %v775, %v775
        %v780 = vld [vmem:[#allocation3] sm:$0xf]
        %v782 = vsel %vm722, %v779, 0
        %v785 = vsel %vm722, %v780, 0
        %787 = vmatprep.subr.bf16.mxu0 0
        %788 = vmatpush1.bf16.xpose.msra.mxu0 0
        %789 = vmatprep.subr.bf16.mxu0 0
        %790 = vmatpush1.bf16.xpose.msra.mxu0 0
        %791 = vmatprep.subr.bf16.mxu0 0
        %792 = vmatpush1.bf16.xpose.msra.mxu0 0
        %793 = vmatprep.subr.bf16.mxu0 0
        %794 = vmatpush1.bf16.xpose.msra.mxu0 0
        %795 = vmatprep.subr.bf16.mxu0 0
        %796 = vmatpush1.bf16.xpose.msra.mxu0 0
        %797 = vmatprep.subr.bf16.mxu0 0
        %798 = vmatpush1.bf16.xpose.msra.mxu0 0
        %799 = vmatprep.subr.bf16.mxu0 0
        %800 = vmatpush1.bf16.xpose.msra.mxu0 0
        %801 = vmatprep.subr.bf16.mxu0 0
        %802 = vmatpush1.bf16.xpose.msra.mxu0 %v785
        %803 = vmatprep.subr.bf16.mxu0 0
        %804 = vmatpush2.bf16.xpose.msra.mxu0 0
        %805 = vmatprep.subr.bf16.mxu0 0
        %806 = vmatpush2.bf16.xpose.msra.mxu0 0
        %807 = vmatprep.subr.bf16.mxu0 0
        %808 = vmatpush2.bf16.xpose.msra.mxu0 0
        %809 = vmatprep.subr.bf16.mxu0 0
        %810 = vmatpush2.bf16.xpose.msra.mxu0 0
        %811 = vmatprep.subr.bf16.mxu0 0
        %812 = vmatpush2.bf16.xpose.msra.mxu0 0
        %813 = vmatprep.subr.bf16.mxu0 0
        %814 = vmatpush2.bf16.xpose.msra.mxu0 0
        %815 = vmatprep.subr.bf16.mxu0 0
        %816 = vmatpush2.bf16.xpose.msra.mxu0 0
        %817 = vmatprep.subr.bf16.mxu0 0
        %818 = vmatpush2.bf16.xpose.msra.mxu0 0
        %819 = vmatprep.mubr.bf16.mxu0 0
        %820 = vmatmul.mubr.bf16.gmra.mxu0 %v782
        %v821 = vpop.f32.mrf.mxu0
        %v822 = vadd.f32 0.0, %v821
        %v823 = vpop.f32.mrf.mxu0
        %v824 = vpop.f32.mrf.mxu0
        %v825 = vpop.f32.mrf.mxu0
        %826 = vdwg.mxu0
        %v827 = vrcp.pop %v778
        %v828 = vmul.f32 %v822, %v827
        %s829 = scalar_lea.vmem [#allocation2], 4
        %v830 = vld [vmem:[%s829] sm:$0xf]
        %832 = vrot.lane.b32.xlu0 %v720, 120
        %v833 = vpop.permute.xlu0 %832
        %v835 = vsel %vm722, %v833, 0
        %v838 = vsel %vm726, %v830, 0
        %840 = vmatprep.subr.bf16.mxu0 0
        %841 = vmatpush1.bf16.msra.mxu0 0
        %842 = vmatprep.subr.bf16.mxu0 0
        %843 = vmatpush1.bf16.msra.mxu0 0
        %844 = vmatprep.subr.bf16.mxu0 0
        %845 = vmatpush1.bf16.msra.mxu0 0
        %846 = vmatprep.subr.bf16.mxu0 0
        %847 = vmatpush1.bf16.msra.mxu0 0
        %848 = vmatprep.subr.bf16.mxu0 0
        %849 = vmatpush1.bf16.msra.mxu0 0
        %850 = vmatprep.subr.bf16.mxu0 0
        %851 = vmatpush1.bf16.msra.mxu0 0
        %852 = vmatprep.subr.bf16.mxu0 0
        %853 = vmatpush1.bf16.msra.mxu0 0
        %854 = vmatprep.subr.bf16.mxu0 0
        %855 = vmatpush1.bf16.msra.mxu0 %v838
        %856 = vmatprep.subr.bf16.mxu0 0
        %857 = vmatpush2.bf16.msra.mxu0 0
        %858 = vmatprep.subr.bf16.mxu0 0
        %859 = vmatpush2.bf16.msra.mxu0 0
        %860 = vmatprep.subr.bf16.mxu0 0
        %861 = vmatpush2.bf16.msra.mxu0 0
        %862 = vmatprep.subr.bf16.mxu0 0
        %863 = vmatpush2.bf16.msra.mxu0 0
        %864 = vmatprep.subr.bf16.mxu0 0
        %865 = vmatpush2.bf16.msra.mxu0 0
        %866 = vmatprep.subr.bf16.mxu0 0
        %867 = vmatpush2.bf16.msra.mxu0 0
        %868 = vmatprep.subr.bf16.mxu0 0
        %869 = vmatpush2.bf16.msra.mxu0 0
        %870 = vmatprep.subr.bf16.mxu0 0
        %871 = vmatpush2.bf16.msra.mxu0 0
        %872 = vmatprep.mubr.bf16.mxu0 0
        %873 = vmatmul.mubr.bf16.gmra.mxu0 %v835
        %v874 = vpop.f32.mrf.mxu0
        %v875 = vadd.f32 0.0, %v874
        %v876 = vpop.f32.mrf.mxu0
        %v877 = vpop.f32.mrf.mxu0
        %v878 = vpop.f32.mrf.mxu0
        %879 = vdwg.mxu0
        %v880 = vsel %vm722, %v875, -inf
        %881 = vmax.xlane.f32.xlu0 %v880
        %v882 = vpop.xlane.xlu0 %881
        %v883 = vsub.f32 %v875, %v882
        %v884 = vmul.f32 %v883, 1.442695
        %v885 = vpow.pop %v884
        %v886 = vsel %vm722, %v885, 0.0
        %887 = vadd.xlane.f32.xlu0 %v886
        %v888 = vpop.xlane.xlu0 %887
        %v889 = vpack.c.bf16 %v885, %v885
        %s890 = scalar_lea.vmem [#allocation3], 4
        %v891 = vld [vmem:[%s890] sm:$0xf]
        %v893 = vsel %vm722, %v889, 0
        %v896 = vsel %vm722, %v891, 0
        %898 = vmatprep.subr.bf16.mxu0 0
        %899 = vmatpush1.bf16.xpose.msra.mxu0 0
        %900 = vmatprep.subr.bf16.mxu0 0
        %901 = vmatpush1.bf16.xpose.msra.mxu0 0
        %902 = vmatprep.subr.bf16.mxu0 0
        %903 = vmatpush1.bf16.xpose.msra.mxu0 0
        %904 = vmatprep.subr.bf16.mxu0 0
        %905 = vmatpush1.bf16.xpose.msra.mxu0 0
        %906 = vmatprep.subr.bf16.mxu0 0
        %907 = vmatpush1.bf16.xpose.msra.mxu0 0
        %908 = vmatprep.subr.bf16.mxu0 0
        %909 = vmatpush1.bf16.xpose.msra.mxu0 0
        %910 = vmatprep.subr.bf16.mxu0 0
        %911 = vmatpush1.bf16.xpose.msra.mxu0 0
        %912 = vmatprep.subr.bf16.mxu0 0
        %913 = vmatpush1.bf16.xpose.msra.mxu0 %v896
        %914 = vmatprep.subr.bf16.mxu0 0
        %915 = vmatpush2.bf16.xpose.msra.mxu0 0
        %916 = vmatprep.subr.bf16.mxu0 0
        %917 = vmatpush2.bf16.xpose.msra.mxu0 0
        %918 = vmatprep.subr.bf16.mxu0 0
        %919 = vmatpush2.bf16.xpose.msra.mxu0 0
        %920 = vmatprep.subr.bf16.mxu0 0
        %921 = vmatpush2.bf16.xpose.msra.mxu0 0
        %922 = vmatprep.subr.bf16.mxu0 0
        %923 = vmatpush2.bf16.xpose.msra.mxu0 0
        %924 = vmatprep.subr.bf16.mxu0 0
        %925 = vmatpush2.bf16.xpose.msra.mxu0 0
        %926 = vmatprep.subr.bf16.mxu0 0
        %927 = vmatpush2.bf16.xpose.msra.mxu0 0
        %928 = vmatprep.subr.bf16.mxu0 0
        %929 = vmatpush2.bf16.xpose.msra.mxu0 0
        %930 = vmatprep.mubr.bf16.mxu0 0
        %931 = vmatmul.mubr.bf16.gmra.mxu0 %v893
        %v932 = vpop.f32.mrf.mxu0
        %v933 = vadd.f32 0.0, %v932
        %v934 = vpop.f32.mrf.mxu0
        %v935 = vpop.f32.mrf.mxu0
        %v936 = vpop.f32.mrf.mxu0
        %937 = vdwg.mxu0
        %v938 = vrcp.pop %v888
        %v939 = vmul.f32 %v933, %v938
        %s940 = scalar_lea.vmem [#allocation2], 8
        %v941 = vld [vmem:[%s940] sm:$0xf]
        %942 = vrot.lane.b32.xlu0 %v720, 112
        %v943 = vpop.permute.xlu0 %942
        %v945 = vsel %vm722, %v943, 0
        %v948 = vsel %vm726, %v941, 0
        %950 = vmatprep.subr.bf16.mxu0 0
        %951 = vmatpush1.bf16.msra.mxu0 0
        %952 = vmatprep.subr.bf16.mxu0 0
        %953 = vmatpush1.bf16.msra.mxu0 0
        %954 = vmatprep.subr.bf16.mxu0 0
        %955 = vmatpush1.bf16.msra.mxu0 0
        %956 = vmatprep.subr.bf16.mxu0 0
        %957 = vmatpush1.bf16.msra.mxu0 0
        %958 = vmatprep.subr.bf16.mxu0 0
        %959 = vmatpush1.bf16.msra.mxu0 0
        %960 = vmatprep.subr.bf16.mxu0 0
        %961 = vmatpush1.bf16.msra.mxu0 0
        %962 = vmatprep.subr.bf16.mxu0 0
        %963 = vmatpush1.bf16.msra.mxu0 0
        %964 = vmatprep.subr.bf16.mxu0 0
        %965 = vmatpush1.bf16.msra.mxu0 %v948
        %966 = vmatprep.subr.bf16.mxu0 0
        %967 = vmatpush2.bf16.msra.mxu0 0
        %968 = vmatprep.subr.bf16.mxu0 0
        %969 = vmatpush2.bf16.msra.mxu0 0
        %970 = vmatprep.subr.bf16.mxu0 0
        %971 = vmatpush2.bf16.msra.mxu0 0
        %972 = vmatprep.subr.bf16.mxu0 0
        %973 = vmatpush2.bf16.msra.mxu0 0
        %974 = vmatprep.subr.bf16.mxu0 0
        %975 = vmatpush2.bf16.msra.mxu0 0
        %976 = vmatprep.subr.bf16.mxu0 0
        %977 = vmatpush2.bf16.msra.mxu0 0
        %978 = vmatprep.subr.bf16.mxu0 0
        %979 = vmatpush2.bf16.msra.mxu0 0
        %980 = vmatprep.subr.bf16.mxu0 0
        %981 = vmatpush2.bf16.msra.mxu0 0
        %982 = vmatprep.mubr.bf16.mxu0 0
        %983 = vmatmul.mubr.bf16.gmra.mxu0 %v945
        %v984 = vpop.f32.mrf.mxu0
        %v985 = vadd.f32 0.0, %v984
        %v986 = vpop.f32.mrf.mxu0
        %v987 = vpop.f32.mrf.mxu0
        %v988 = vpop.f32.mrf.mxu0
        %989 = vdwg.mxu0
        %v990 = vsel %vm722, %v985, -inf
        %991 = vmax.xlane.f32.xlu0 %v990
        %v992 = vpop.xlane.xlu0 %991
        %v993 = vsub.f32 %v985, %v992
        %v994 = vmul.f32 %v993, 1.442695
        %v995 = vpow.pop %v994
        %v996 = vsel %vm722, %v995, 0.0
        %997 = vadd.xlane.f32.xlu0 %v996
        %v998 = vpop.xlane.xlu0 %997
        %v999 = vpack.c.bf16 %v995, %v995
        %s1000 = scalar_lea.vmem [#allocation3], 8
        %v1001 = vld [vmem:[%s1000] sm:$0xf]
        %v1003 = vsel %vm722, %v999, 0
        %v1006 = vsel %vm722, %v1001, 0
        %1008 = vmatprep.subr.bf16.mxu0 0
        %1009 = vmatpush1.bf16.xpose.msra.mxu0 0
        %1010 = vmatprep.subr.bf16.mxu0 0
        %1011 = vmatpush1.bf16.xpose.msra.mxu0 0
        %1012 = vmatprep.subr.bf16.mxu0 0
        %1013 = vmatpush1.bf16.xpose.msra.mxu0 0
        %1014 = vmatprep.subr.bf16.mxu0 0
        %1015 = vmatpush1.bf16.xpose.msra.mxu0 0
        %1016 = vmatprep.subr.bf16.mxu0 0
        %1017 = vmatpush1.bf16.xpose.msra.mxu0 0
        %1018 = vmatprep.subr.bf16.mxu0 0
        %1019 = vmatpush1.bf16.xpose.msra.mxu0 0
        %1020 = vmatprep.subr.bf16.mxu0 0
        %1021 = vmatpush1.bf16.xpose.msra.mxu0 0
        %1022 = vmatprep.subr.bf16.mxu0 0
        %1023 = vmatpush1.bf16.xpose.msra.mxu0 %v1006
        %1024 = vmatprep.subr.bf16.mxu0 0
        %1025 = vmatpush2.bf16.xpose.msra.mxu0 0
        %1026 = vmatprep.subr.bf16.mxu0 0
        %1027 = vmatpush2.bf16.xpose.msra.mxu0 0
        %1028 = vmatprep.subr.bf16.mxu0 0
        %1029 = vmatpush2.bf16.xpose.msra.mxu0 0
        %1030 = vmatprep.subr.bf16.mxu0 0
        %1031 = vmatpush2.bf16.xpose.msra.mxu0 0
        %1032 = vmatprep.subr.bf16.mxu0 0
        %1033 = vmatpush2.bf16.xpose.msra.mxu0 0
        %1034 = vmatprep.subr.bf16.mxu0 0
        %1035 = vmatpush2.bf16.xpose.msra.mxu0 0
        %1036 = vmatprep.subr.bf16.mxu0 0
        %1037 = vmatpush2.bf16.xpose.msra.mxu0 0
        %1038 = vmatprep.subr.bf16.mxu0 0
        %1039 = vmatpush2.bf16.xpose.msra.mxu0 0
        %1040 = vmatprep.mubr.bf16.mxu0 0
        %1041 = vmatmul.mubr.bf16.gmra.mxu0 %v1003
        %v1042 = vpop.f32.mrf.mxu0
        %v1043 = vadd.f32 0.0, %v1042
        %v1044 = vpop.f32.mrf.mxu0
        %v1045 = vpop.f32.mrf.mxu0
        %v1046 = vpop.f32.mrf.mxu0
        %1047 = vdwg.mxu0
        %v1048 = vrcp.pop %v998
        %v1049 = vmul.f32 %v1043, %v1048
        %s1050 = scalar_lea.vmem [#allocation2], 12
        %v1051 = vld [vmem:[%s1050] sm:$0xf]
        %1052 = vrot.lane.b32.xlu0 %v720, 104
        %v1053 = vpop.permute.xlu0 %1052
        %v1055 = vsel %vm722, %v1053, 0
        %v1058 = vsel %vm726, %v1051, 0
        %1060 = vmatprep.subr.bf16.mxu0 0
        %1061 = vmatpush1.bf16.msra.mxu0 0
        %1062 = vmatprep.subr.bf16.mxu0 0
        %1063 = vmatpush1.bf16.msra.mxu0 0
        %1064 = vmatprep.subr.bf16.mxu0 0
        %1065 = vmatpush1.bf16.msra.mxu0 0
        %1066 = vmatprep.subr.bf16.mxu0 0
        %1067 = vmatpush1.bf16.msra.mxu0 0
        %1068 = vmatprep.subr.bf16.mxu0 0
        %1069 = vmatpush1.bf16.msra.mxu0 0
        %1070 = vmatprep.subr.bf16.mxu0 0
        %1071 = vmatpush1.bf16.msra.mxu0 0
        %1072 = vmatprep.subr.bf16.mxu0 0
        %1073 = vmatpush1.bf16.msra.mxu0 0
        %1074 = vmatprep.subr.bf16.mxu0 0
        %1075 = vmatpush1.bf16.msra.mxu0 %v1058
        %1076 = vmatprep.subr.bf16.mxu0 0
        %1077 = vmatpush2.bf16.msra.mxu0 0
        %1078 = vmatprep.subr.bf16.mxu0 0
        %1079 = vmatpush2.bf16.msra.mxu0 0
        %1080 = vmatprep.subr.bf16.mxu0 0
        %1081 = vmatpush2.bf16.msra.mxu0 0
        %1082 = vmatprep.subr.bf16.mxu0 0
        %1083 = vmatpush2.bf16.msra.mxu0 0
        %1084 = vmatprep.subr.bf16.mxu0 0
        %1085 = vmatpush2.bf16.msra.mxu0 0
        %1086 = vmatprep.subr.bf16.mxu0 0
        %1087 = vmatpush2.bf16.msra.mxu0 0
        %1088 = vmatprep.subr.bf16.mxu0 0
        %1089 = vmatpush2.bf16.msra.mxu0 0
        %1090 = vmatprep.subr.bf16.mxu0 0
        %1091 = vmatpush2.bf16.msra.mxu0 0
        %1092 = vmatprep.mubr.bf16.mxu0 0
        %1093 = vmatmul.mubr.bf16.gmra.mxu0 %v1055
        %v1094 = vpop.f32.mrf.mxu0
        %v1095 = vadd.f32 0.0, %v1094
        %v1096 = vpop.f32.mrf.mxu0
        %v1097 = vpop.f32.mrf.mxu0
        %v1098 = vpop.f32.mrf.mxu0
        %1099 = vdwg.mxu0
        %v1100 = vsel %vm722, %v1095, -inf
        %1101 = vmax.xlane.f32.xlu0 %v1100
        %v1102 = vpop.xlane.xlu0 %1101
        %v1103 = vsub.f32 %v1095, %v1102
        %v1104 = vmul.f32 %v1103, 1.442695
        %v1105 = vpow.pop %v1104
        %v1106 = vsel %vm722, %v1105, 0.0
        %1107 = vadd.xlane.f32.xlu0 %v1106
        %v1108 = vpop.xlane.xlu0 %1107
        %v1109 = vpack.c.bf16 %v1105, %v1105
        %s1110 = scalar_lea.vmem [#allocation3], 12
        %v1111 = vld [vmem:[%s1110] sm:$0xf]
        %v1113 = vsel %vm722, %v1109, 0
        %v1116 = vsel %vm722, %v1111, 0
        %1118 = vmatprep.subr.bf16.mxu0 0
        %1119 = vmatpush1.bf16.xpose.msra.mxu0 0
        %1120 = vmatprep.subr.bf16.mxu0 0
        %1121 = vmatpush1.bf16.xpose.msra.mxu0 0
        %1122 = vmatprep.subr.bf16.mxu0 0
        %1123 = vmatpush1.bf16.xpose.msra.mxu0 0
        %1124 = vmatprep.subr.bf16.mxu0 0
        %1125 = vmatpush1.bf16.xpose.msra.mxu0 0
        %1126 = vmatprep.subr.bf16.mxu0 0
        %1127 = vmatpush1.bf16.xpose.msra.mxu0 0
        %1128 = vmatprep.subr.bf16.mxu0 0
        %1129 = vmatpush1.bf16.xpose.msra.mxu0 0
        %1130 = vmatprep.subr.bf16.mxu0 0
        %1131 = vmatpush1.bf16.xpose.msra.mxu0 0
        %1132 = vmatprep.subr.bf16.mxu0 0
        %1133 = vmatpush1.bf16.xpose.msra.mxu0 %v1116
        %1134 = vmatprep.subr.bf16.mxu0 0
        %1135 = vmatpush2.bf16.xpose.msra.mxu0 0
        %1136 = vmatprep.subr.bf16.mxu0 0
        %1137 = vmatpush2.bf16.xpose.msra.mxu0 0
        %1138 = vmatprep.subr.bf16.mxu0 0
        %1139 = vmatpush2.bf16.xpose.msra.mxu0 0
        %1140 = vmatprep.subr.bf16.mxu0 0
        %1141 = vmatpush2.bf16.xpose.msra.mxu0 0
        %1142 = vmatprep.subr.bf16.mxu0 0
        %1143 = vmatpush2.bf16.xpose.msra.mxu0 0
        %1144 = vmatprep.subr.bf16.mxu0 0
        %1145 = vmatpush2.bf16.xpose.msra.mxu0 0
        %1146 = vmatprep.subr.bf16.mxu0 0
        %1147 = vmatpush2.bf16.xpose.msra.mxu0 0
        %1148 = vmatprep.subr.bf16.mxu0 0
        %1149 = vmatpush2.bf16.xpose.msra.mxu0 0
        %1150 = vmatprep.mubr.bf16.mxu0 0
        %1151 = vmatmul.mubr.bf16.gmra.mxu0 %v1113
        %v1152 = vpop.f32.mrf.mxu0
        %v1153 = vadd.f32 0.0, %v1152
        %v1154 = vpop.f32.mrf.mxu0
        %v1155 = vpop.f32.mrf.mxu0
        %v1156 = vpop.f32.mrf.mxu0
        %1157 = vdwg.mxu0
        %v1158 = vrcp.pop %v1108
        %v1159 = vmul.f32 %v1153, %v1158
        %1161 = vrot.lane.b32.xlu0 %v939, 8
        %v1162 = vpop.permute.xlu0 %1161
        %1165 = vrot.lane.b32.xlu0 %v1049, 16
        %v1166 = vpop.permute.xlu0 %1165
        %1169 = vrot.lane.b32.xlu0 %v1159, 24
        %v1170 = vpop.permute.xlu0 %1169
        %v1172 = vsel %vm722, %v828, %v1162
        %vm1173 = vcmask 130048
        %v1174 = vsel %vm1173, %v1172, %v1166
        %vm1175 = vcmask 195584
        %v1176 = vsel %vm1175, %v1174, %v1170
        %1177 = vst.msk [vmem:[%s378] sm:$0xff] %vm669, %v1176
        %s1178 = sand.u32 %s234, 1
        %s1179 = scalar_lea.sflag [#allocation5], %s1178
        %s1180 = sand.u32 %s234, 1
        %s1181 = smul.addr %s1180, 8
        %s1182 = scalar_lea.vmem [#allocation4], %s1181
        // Predicated region
        $region53: #{tpu_custom_call.1} parent=47 // pred_check
          %p1183 = pneg %p244
        $region54: #{tpu_custom_call.1} parent=47 // pred_check_branch
          %1185 = sbr.rel (%p1183) target = $region56
        $region55: #{tpu_custom_call.1} parent=47 // pred_region
          %s1187 = ssub.s32 128, 128
          %1188 = vsyncadd %s1179, %s1187
          %s1189 = sadd.s32 %s27, %s28
          %s1190 = sadd.s32 %s1189, %s26
          %s1191 = smul.addr %s1190, 128
          %s1192 = scalar_lea.hbm %s7, %s1191
          %s1194 = sshll.u32 %s1182, 4
          %s1195 = int_to_ptr.vmem [resolvable:$true] %s1194
          %1197 = dma.vmem_to_hbm [thread:$0]  %s1195, 128, %s1192, %s1179
        $region56: #{tpu_custom_call.1} parent=47 // pred_fallthru
          _
      $region48: #{tpu_custom_call.1} parent=5 // pred_fallthru
        _
      %p1198 = scmp.le.s32.totalorder 2, %s16
      // Predicated region
      $region57: #{tpu_custom_call.1} parent=5 // pred_check
        %p1199 = pneg %p1198
      $region58: #{tpu_custom_call.1} parent=5 // pred_check_branch
        %1201 = sbr.rel (%p1199) target = $region60
      $region59: #{tpu_custom_call.1} parent=5 // pred_region
        %s1202 = ssub.s32 %s16, 2
        // Predicated region
        $region61: #{tpu_custom_call.1} parent=59 // pred_check
          %p1203 = pneg %p250
        $region62: #{tpu_custom_call.1} parent=59 // pred_check_branch
          %1205 = sbr.rel (%p1203) target = $region64
        $region63: #{tpu_custom_call.1} parent=59 // pred_region
          %s1206 = sand.u32 %s235, 1
          %s1207 = scalar_lea.sflag [#allocation5], %s1206
          %s1208 = sand.u32 %s235, 1
          %s1209 = smul.addr %s1208, 8
          %s1210 = scalar_lea.vmem [#allocation4], %s1209
          %1211 = dma.done %s1207, 128
        $region64: #{tpu_custom_call.1} parent=59 // pred_fallthru
          _
      $region60: #{tpu_custom_call.1} parent=5 // pred_fallthru
        _
    $region6: #{tpu_custom_call.1} parent=1 // loop_footer
      %s20 = sadd.s32 1, %s16
    $region7: #{tpu_custom_call.1} parent=1 // loop_footer_branch
      %15 = sbr.rel target = $region3
    $region8: #{tpu_custom_call.1} parent=1 // loop_exit
      _
    %1212 = vsyncpa [#allocation5], 1
    %s1213 = scalar_lea.sflag [#allocation5], 1
    %1214 = vsyncpa %s1213, 1

</llo_original>
